<compile_context>
chip_gen: v5e
topology: v5e:2x2
jax: 0.10.0
libtpu: 0.0.40
codegen_flags: <defaults>
</compile_context>

<pallas_src>
import functools
import math
import numpy as np

import jax
import jax.numpy as jnp
from jax import lax
from jax.experimental import pallas as pl
from jax.experimental.pallas import tpu as pltpu


# ----------------------------------------------------------------------------
# Shared bidirectional GRU recurrence (PyTorch GRU equations, both directions).
#   gi_ref  : VMEM (S*B, 6H)  input projections, cols = [fwd r|z|n | bwd r|z|n]
#   out_ref : VMEM (S*B, 2H)  cols 0:H = forward hidden at t, cols H:2H = backward at t
#   whh_ref : (H, 6H)  hidden weights per direction (dense, no zero block)
#   bhh_ref : (1, 6H)  hidden biases
#   pe_ref  : optional (S, 6H) per-timestep additive term (= pe @ Wih + bih, layer 0 only)
# ----------------------------------------------------------------------------
def _bigru_recurrence(gi_ref, out_ref, whh_ref, bhh_ref, *, seq_len, batch, hidden,
                      pe_ref=None):
    S, B, H = seq_len, batch, hidden

    # Hoist loop-invariant weights; pre-broadcast biases (JAX does not CSE broadcasts).
    whh = whh_ref[...]                                        # (H, 6H)
    whh_f = whh[:, 0:3 * H]
    whh_b = whh[:, 3 * H:6 * H]
    bhh = bhh_ref[...]                                        # (1, 6H)
    bhh_f = jnp.broadcast_to(bhh[:, 0:3 * H], (B, 3 * H))
    bhh_b = jnp.broadcast_to(bhh[:, 3 * H:6 * H], (B, 3 * H))

    def step(t, carry):
        h_f, h_b = carry                                      # (B, H) each, kept in vregs
        fwd_rows = t * B              # forward direction consumes x_t
        bwd_rows = (S - 1 - t) * B    # backward direction consumes x_{S-1-t}
        gi_f = gi_ref[pl.ds(fwd_rows, B), 0:3 * H]            # (B, 3H) [r|z|n]
        gi_b = gi_ref[pl.ds(bwd_rows, B), 3 * H:6 * H]        # (B, 3H) [r|z|n]
        if pe_ref is not None:   # layer 0: add (pe @ Wih + bih) row for this timestep
            gi_f = gi_f + pe_ref[pl.ds(t, 1), 0:3 * H]
            gi_b = gi_b + pe_ref[pl.ds(S - 1 - t, 1), 3 * H:6 * H]

        # Two dense (B,H)@(H,3H) dots per step -- no wasted block-diagonal zero MACs.
        gh_f = jnp.dot(h_f, whh_f, preferred_element_type=jnp.float32) + bhh_f
        gh_b = jnp.dot(h_b, whh_b, preferred_element_type=jnp.float32) + bhh_b

        # ---- forward direction ----
        rz_f = jax.nn.sigmoid(gi_f[:, 0:2 * H] + gh_f[:, 0:2 * H])
        r_f = rz_f[:, 0:H]
        z_f = rz_f[:, H:2 * H]
        n_f = jnp.tanh(gi_f[:, 2 * H:3 * H] + r_f * gh_f[:, 2 * H:3 * H])
        h_f = (1.0 - z_f) * n_f + z_f * h_f

        # ---- backward direction ----
        rz_b = jax.nn.sigmoid(gi_b[:, 0:2 * H] + gh_b[:, 0:2 * H])
        r_b = rz_b[:, 0:H]
        z_b = rz_b[:, H:2 * H]
        n_b = jnp.tanh(gi_b[:, 2 * H:3 * H] + r_b * gh_b[:, 2 * H:3 * H])
        h_b = (1.0 - z_b) * n_b + z_b * h_b

        # Fused "concat": both directions write halves of the same output buffer.
        out_ref[pl.ds(fwd_rows, B), 0:H] = h_f
        out_ref[pl.ds(bwd_rows, B), H:2 * H] = h_b
        return (h_f, h_b)

    h0 = jnp.zeros((B, H), jnp.float32)     # PyTorch default h0 = 0
    lax.fori_loop(0, S, step, (h0, h0), unroll=min(8, S))


# ----------------------------------------------------------------------------
# Kernel 1: fused embedding gather + positional encoding + bidirectional GRU layer 0.
#   ids_ref      : VMEM (S*B, 1) int32, time-major flattened (row s*B+b = ids[b,s])
#   emb_proj_ref : VMEM (V, 6H)   = emb @ Wih0   (parameter fold, done once outside)
#   pe_bih_ref   : VMEM (S, 6H)   = pe[:S] @ Wih0 + bih0
#   whh_ref      : (H, 6H), bhh_ref : (1, 6H)
#   out_ref      : (S*B, 2H)
#   gi_ref       : VMEM scratch (S*B, 6H)
# ----------------------------------------------------------------------------
def bigru_layer0_kernel(ids_ref, emb_proj_ref, pe_bih_ref, whh_ref, bhh_ref,
                        out_ref, gi_ref, *, seq_len, batch):
    V = emb_proj_ref.shape[0]
    SB = gi_ref.shape[0]
    H = whh_ref.shape[0]
    # Vectorized in-kernel gather fused with the input projection:
    #   gi[row] = emb[ids[row]] @ Wih  ==  onehot(ids)[row] @ (emb @ Wih)
    ids = ids_ref[...]                                               # (S*B, 1) int32
    iota_v = lax.broadcasted_iota(jnp.int32, (SB, V), 1)
    onehot = jnp.where(ids == iota_v, 1.0, 0.0).astype(jnp.float32)  # (S*B, V)
    gi_ref[...] = jnp.dot(onehot, emb_proj_ref[...],
                          preferred_element_type=jnp.float32)        # (S*B, 6H)
    _bigru_recurrence(gi_ref, out_ref, whh_ref, bhh_ref,
                      seq_len=seq_len, batch=batch, hidden=H, pe_ref=pe_bih_ref)


# ----------------------------------------------------------------------------
# Kernel 2: fused bidirectional GRU layer (layers >= 1).
#   x_ref   : (S*B, Din) time-major flattened input
#   wih_ref : (Din, 6H), whh_ref : (H, 6H), bih_ref/bhh_ref : (1, 6H)
#   out_ref : (S*B, 2H); gi_ref : VMEM scratch (S*B, 6H)
# ----------------------------------------------------------------------------
def bigru_kernel(x_ref, wih_ref, whh_ref, bih_ref, bhh_ref, out_ref, gi_ref,
                 *, seq_len, batch):
    H = whh_ref.shape[0]
    # Input projections for all timesteps / directions / gates: one wide matmul.
    gi_ref[...] = (jnp.dot(x_ref[...], wih_ref[...], preferred_element_type=jnp.float32)
                   + bih_ref[...])
    _bigru_recurrence(gi_ref, out_ref, whh_ref, bhh_ref,
                      seq_len=seq_len, batch=batch, hidden=H)


def bigru_layer0(ids_tm, emb_proj, pe_bih, lp, *, seq_len, batch):
    H = lp["whh"].shape[0]
    SB = seq_len * batch
    kernel = functools.partial(bigru_layer0_kernel, seq_len=seq_len, batch=batch)
    return pl.pallas_call(
        kernel,
        out_shape=jax.ShapeDtypeStruct((SB, 2 * H), jnp.float32),
        scratch_shapes=[pltpu.VMEM((SB, 6 * H), jnp.float32)],
    )(ids_tm, emb_proj, pe_bih, lp["whh"], lp["bhh"])


def bigru_layer(x_flat, lp, *, seq_len, batch):
    H = lp["whh"].shape[0]
    SB = seq_len * batch
    kernel = functools.partial(bigru_kernel, seq_len=seq_len, batch=batch)
    return pl.pallas_call(
        kernel,
        out_shape=jax.ShapeDtypeStruct((SB, 2 * H), jnp.float32),
        scratch_shapes=[pltpu.VMEM((SB, 6 * H), jnp.float32)],
    )(x_flat, lp["wih"], lp["whh"], lp["bih"], lp["bhh"])


def embedding_layer_forward(params, pe, input_ids):
    """Full forward pass of the PyTorch EmbeddingLayer module (eval semantics)."""
    B, S = input_ids.shape
    d_model = params["emb"].shape[1]
    lp0 = params["gru"][0]

    # Parameter / buffer folding (input-independent; could be hoisted to init time):
    emb_proj = jnp.dot(params["emb"], lp0["wih"])          # (V, 6H) = emb @ Wih0
    pe_bih = jnp.dot(pe[:S], lp0["wih"]) + lp0["bih"]      # (S, 6H) = pe @ Wih0 + bih0
    # time-major flattened ids: row s*B+b = ids[b,s]
    ids_tm = jnp.transpose(input_ids).reshape(S * B, 1).astype(jnp.int32)

    x_flat = bigru_layer0(ids_tm, emb_proj, pe_bih, lp0, seq_len=S, batch=B)  # (S*B, 2H)
    for lp in params["gru"][1:]:
        x_flat = bigru_layer(x_flat, lp, seq_len=S, batch=B)                  # (S*B, 2H)
        # inter-layer dropout (p=0.3) = identity in eval mode.
    return jnp.transpose(x_flat.reshape(S, B, d_model), (1, 0, 2))            # (B, S, D)


# ----------------------------------------------------------------------------
# Deterministic parameter / buffer construction (matching the nn.Module)
# ----------------------------------------------------------------------------
def make_pe(max_len, d_model):
    position = np.arange(max_len, dtype=np.float32)[:, None]
    div_term = np.exp(np.arange(0, d_model, 2, dtype=np.float32)
                      * (-math.log(10000.0) / d_model))
    pe = np.zeros((max_len, d_model), np.float32)
    pe[:, 0::2] = np.sin(position * div_term)
    pe[:, 1::2] = np.cos(position * div_term)
    return jnp.asarray(pe)


def init_params(key, vocab_size, d_model):
    H = d_model // 2
    bound = 1.0 / math.sqrt(H)
    key, k_emb = jax.random.split(key)
    params = {"emb": jax.random.normal(k_emb, (vocab_size, d_model), jnp.float32)}

    def pack_gate_cols(w3):      # (3, H_out, Din) -> (Din, 3*H_out), columns = [r | z | n]
        return jnp.transpose(w3, (2, 0, 1)).reshape(w3.shape[2], 3 * w3.shape[1])

    layers = []
    for _layer in range(2):
        din = d_model                            # layer0: d_model; layer1: 2H == d_model
        dir_packs = []
        for _direction in range(2):
            key, k1, k2, k3, k4 = jax.random.split(key, 5)
            wih = jax.random.uniform(k1, (3, H, din), jnp.float32, -bound, bound)
            whh = jax.random.uniform(k2, (3, H, H), jnp.float32, -bound, bound)
            bih = jax.random.uniform(k3, (3, H), jnp.float32, -bound, bound)
            bhh = jax.random.uniform(k4, (3, H), jnp.float32, -bound, bound)
            dir_packs.append((pack_gate_cols(wih), pack_gate_cols(whh),
                              bih.reshape(1, 3 * H), bhh.reshape(1, 3 * H)))
        (wif, whf, bif, bhf), (wib, whb, bib, bhb) = dir_packs
        layers.append(dict(
            wih=jnp.concatenate([wif, wib], axis=1),   # (Din, 6H)
            whh=jnp.concatenate([whf, whb], axis=1),   # (H, 6H) dense per-direction
            bih=jnp.concatenate([bif, bib], axis=1),   # (1, 6H)
            bhh=jnp.concatenate([bhf, bhb], axis=1),   # (1, 6H)
        ))
    params["gru"] = layers
    return params


# ----------------------------------------------------------------------------
# Pure-JAX reference (same math) for correctness checking
# ----------------------------------------------------------------------------
def _ref_gru_dir(x_sbd, wih_cols, whh_cols, bih_row, bhh_row):
    S, B, _ = x_sbd.shape
    H = whh_cols.shape[0]
    h = jnp.zeros((B, H), jnp.float32)
    outs = []
    for t in range(S):
        gi = x_sbd[t] @ wih_cols + bih_row
        gh = h @ whh_cols + bhh_row
        r = jax.nn.sigmoid(gi[:, 0:H] + gh[:, 0:H])
        z = jax.nn.sigmoid(gi[:, H:2 * H] + gh[:, H:2 * H])
        n = jnp.tanh(gi[:, 2 * H:] + r * gh[:, 2 * H:])
        h = (1.0 - z) * n + z * h
        outs.append(h)
    return jnp.stack(outs)


def _ref_forward(params, pe, input_ids):
    B, S = input_ids.shape
    x = jnp.take(params["emb"], input_ids, axis=0) + pe[:S][None, :, :]
    layer_in = jnp.transpose(x, (1, 0, 2))                      # (S, B, D)
    for lp in params["gru"]:
        H = lp["whh"].shape[0]
        out_f = _ref_gru_dir(layer_in, lp["wih"][:, :3 * H], lp["whh"][:, :3 * H],
                             lp["bih"][:, :3 * H], lp["bhh"][:, :3 * H])
        out_b = _ref_gru_dir(layer_in[::-1], lp["wih"][:, 3 * H:], lp["whh"][:, 3 * H:],
                             lp["bih"][:, 3 * H:], lp["bhh"][:, 3 * H:])[::-1]
        layer_in = jnp.concatenate([out_f, out_b], axis=-1)
    return jnp.transpose(layer_in, (1, 0, 2))


# ----------------------------------------------------------------------------
if __name__ == "__main__":
    VOCAB = 50
    D_MODEL = 32          # d_model; GRU hidden = 16 per direction, bidirectional -> 32
    BATCH = 2
    SEQ = 8
    MAX_LEN = 51

    key = jax.random.PRNGKey(0)
    key, k_params, k_ids = jax.random.split(key, 3)

    params = init_params(k_params, VOCAB, D_MODEL)
    pe = make_pe(MAX_LEN, D_MODEL)
    input_ids = jax.random.randint(k_ids, (BATCH, SEQ), 0, VOCAB, dtype=jnp.int32)

    out = jax.block_until_ready(embedding_layer_forward(params, pe, input_ids))
    assert out.shape == (BATCH, SEQ, D_MODEL), out.shape

    ref = jax.block_until_ready(_ref_forward(params, pe, input_ids))
    np.testing.assert_allclose(np.asarray(out), np.asarray(ref), atol=1e-4, rtol=1e-4)

    print("KERNEL_OK")
</pallas_src>

<mosaic_0001>
module attributes {stable_mosaic.version = 11 : i64} {
  func.func @bigru_layer0_kernel(%arg0: memref<16x1xi32, #tpu.memory_space<vmem>>, %arg1: memref<50x96xf32, #tpu.memory_space<vmem>>, %arg2: memref<8x96xf32, #tpu.memory_space<vmem>>, %arg3: memref<16x96xf32, #tpu.memory_space<vmem>>, %arg4: memref<1x96xf32, #tpu.memory_space<vmem>>, %arg5: memref<16x32xf32, #tpu.memory_space<vmem>>, %arg6: memref<16x96xf32, #tpu.memory_space<vmem>>) attributes {dimension_semantics = [], scalar_prefetch = 0 : i64, scratch_operands = 1 : i64, tpu.core_type = #tpu.core_type<tc>} {
    %c0 = arith.constant 0 : index
    %c0_0 = arith.constant 0 : index
    %0 = vector.load %arg0[%c0, %c0_0] : memref<16x1xi32, #tpu.memory_space<vmem>>, vector<16x1xi32>
    %1 = tpu.iota {dimensions = array<i32: 1>} : vector<16x50xi32>
    %2 = vector.broadcast %0 : vector<16x1xi32> to vector<16x50xi32>
    %3 = arith.cmpi eq, %2, %1 : vector<16x50xi32>
    %cst = arith.constant 1.000000e+00 : f32
    %cst_1 = arith.constant 0.000000e+00 : f32
    %4 = vector.broadcast %cst : f32 to vector<16x50xf32>
    %5 = vector.broadcast %cst_1 : f32 to vector<16x50xf32>
    %6 = arith.select %3, %4, %5 : vector<16x50xi1>, vector<16x50xf32>
    %c0_2 = arith.constant 0 : index
    %c0_3 = arith.constant 0 : index
    %7 = vector.load %arg1[%c0_2, %c0_3] : memref<50x96xf32, #tpu.memory_space<vmem>>, vector<50x96xf32>
    %cst_4 = arith.constant dense<0.000000e+00> : vector<16x96xf32>
    %8 = tpu.matmul %6, %7, %cst_4 {dimension_numbers = #tpu.dot_dimension_numbers<[1], [0], [0], [1], [0, 0, 1, 1], [], []>} : vector<16x50xf32>, vector<50x96xf32>, vector<16x96xf32> -> vector<16x96xf32>
    %c0_5 = arith.constant 0 : index
    %c0_6 = arith.constant 0 : index
    %9 = vector.load %arg6[%c0_5, %c0_6] : memref<16x96xf32, #tpu.memory_space<vmem>>, vector<16x96xf32>
    tpu.vector_store %arg6[%c0_5, %c0_6], %8 {strides = array<i32>} : memref<16x96xf32, #tpu.memory_space<vmem>>, vector<16x96xf32>,
    %c0_7 = arith.constant 0 : index
    %c0_8 = arith.constant 0 : index
    %10 = vector.load %arg3[%c0_7, %c0_8] : memref<16x96xf32, #tpu.memory_space<vmem>>, vector<16x96xf32>
    %11 = vector.extract_strided_slice %10 {offsets = [0, 0], sizes = [16, 48], strides = [1, 1]} : vector<16x96xf32> to vector<16x48xf32>
    %12 = vector.extract_strided_slice %10 {offsets = [0, 48], sizes = [16, 48], strides = [1, 1]} : vector<16x96xf32> to vector<16x48xf32>
    %c0_9 = arith.constant 0 : index
    %c0_10 = arith.constant 0 : index
    %13 = vector.load %arg4[%c0_9, %c0_10] : memref<1x96xf32, #tpu.memory_space<vmem>>, vector<1x96xf32>
    %14 = vector.extract_strided_slice %13 {offsets = [0, 0], sizes = [1, 48], strides = [1, 1]} : vector<1x96xf32> to vector<1x48xf32>
    %15 = vector.shape_cast %14 : vector<1x48xf32> to vector<1x48xf32>
    %16 = vector.broadcast %15 : vector<1x48xf32> to vector<2x48xf32>
    %17 = vector.extract_strided_slice %13 {offsets = [0, 48], sizes = [1, 48], strides = [1, 1]} : vector<1x96xf32> to vector<1x48xf32>
    %18 = vector.shape_cast %17 : vector<1x48xf32> to vector<1x48xf32>
    %19 = vector.broadcast %18 : vector<1x48xf32> to vector<2x48xf32>
    %cst_11 = arith.constant 0.000000e+00 : f32
    %20 = vector.broadcast %cst_11 : f32 to vector<2x16xf32>
    %c0_i32 = arith.constant 0 : i32
    %c2_i32 = arith.constant 2 : i32
    %21 = arith.muli %c0_i32, %c2_i32 : i32
    %c7_i32 = arith.constant 7 : i32
    %22 = arith.subi %c7_i32, %c0_i32 : i32
    %c2_i32_12 = arith.constant 2 : i32
    %23 = arith.muli %22, %c2_i32_12 : i32
    %24 = arith.index_cast %21 : i32 to index
    %c0_13 = arith.constant 0 : index
    %25 = vector.load %arg6[%24, %c0_13] : memref<16x96xf32, #tpu.memory_space<vmem>>, vector<2x48xf32>
    %26 = arith.index_cast %23 : i32 to index
    %c48 = arith.constant 48 : index
    %27 = vector.load %arg6[%26, %c48] : memref<16x96xf32, #tpu.memory_space<vmem>>, vector<2x48xf32>
    %28 = arith.index_cast %c0_i32 : i32 to index
    %c0_14 = arith.constant 0 : index
    %29 = vector.load %arg2[%28, %c0_14] : memref<8x96xf32, #tpu.memory_space<vmem>>, vector<1x48xf32>
    %30 = vector.broadcast %29 : vector<1x48xf32> to vector<2x48xf32>
    %31 = arith.addf %25, %30 : vector<2x48xf32>
    %c7_i32_15 = arith.constant 7 : i32
    %32 = arith.subi %c7_i32_15, %c0_i32 : i32
    %33 = arith.index_cast %32 : i32 to index
    %c48_16 = arith.constant 48 : index
    %34 = vector.load %arg2[%33, %c48_16] : memref<8x96xf32, #tpu.memory_space<vmem>>, vector<1x48xf32>
    %35 = vector.broadcast %34 : vector<1x48xf32> to vector<2x48xf32>
    %36 = arith.addf %27, %35 : vector<2x48xf32>
    %cst_17 = arith.constant dense<0.000000e+00> : vector<2x48xf32>
    %37 = tpu.matmul %20, %11, %cst_17 {dimension_numbers = #tpu.dot_dimension_numbers<[1], [0], [0], [1], [0, 0, 1, 1], [], []>} : vector<2x16xf32>, vector<16x48xf32>, vector<2x48xf32> -> vector<2x48xf32>
    %38 = arith.addf %37, %16 : vector<2x48xf32>
    %cst_18 = arith.constant dense<0.000000e+00> : vector<2x48xf32>
    %39 = tpu.matmul %20, %12, %cst_18 {dimension_numbers = #tpu.dot_dimension_numbers<[1], [0], [0], [1], [0, 0, 1, 1], [], []>} : vector<2x16xf32>, vector<16x48xf32>, vector<2x48xf32> -> vector<2x48xf32>
    %40 = arith.addf %39, %19 : vector<2x48xf32>
    %41 = vector.extract_strided_slice %31 {offsets = [0, 0], sizes = [2, 32], strides = [1, 1]} : vector<2x48xf32> to vector<2x32xf32>
    %42 = vector.extract_strided_slice %38 {offsets = [0, 0], sizes = [2, 32], strides = [1, 1]} : vector<2x48xf32> to vector<2x32xf32>
    %43 = arith.addf %41, %42 : vector<2x32xf32>
    %44 = arith.negf %43 : vector<2x32xf32>
    %45 = math.exp %44 : vector<2x32xf32>
    %cst_19 = arith.constant 1.000000e+00 : f32
    %46 = vector.broadcast %cst_19 : f32 to vector<2x32xf32>
    %47 = arith.addf %46, %45 : vector<2x32xf32>
    %48 = arith.divf %46, %47 : vector<2x32xf32>
    %49 = vector.extract_strided_slice %48 {offsets = [0, 0], sizes = [2, 16], strides = [1, 1]} : vector<2x32xf32> to vector<2x16xf32>
    %50 = vector.extract_strided_slice %48 {offsets = [0, 16], sizes = [2, 16], strides = [1, 1]} : vector<2x32xf32> to vector<2x16xf32>
    %51 = vector.extract_strided_slice %31 {offsets = [0, 32], sizes = [2, 16], strides = [1, 1]} : vector<2x48xf32> to vector<2x16xf32>
    %52 = vector.extract_strided_slice %38 {offsets = [0, 32], sizes = [2, 16], strides = [1, 1]} : vector<2x48xf32> to vector<2x16xf32>
    %53 = arith.mulf %49, %52 : vector<2x16xf32>
    %54 = arith.addf %51, %53 : vector<2x16xf32>
    %55 = math.tanh %54 : vector<2x16xf32>
    %cst_20 = arith.constant 1.000000e+00 : f32
    %56 = vector.broadcast %cst_20 : f32 to vector<2x16xf32>
    %57 = arith.subf %56, %50 : vector<2x16xf32>
    %58 = arith.mulf %57, %55 : vector<2x16xf32>
    %59 = arith.mulf %50, %20 : vector<2x16xf32>
    %60 = arith.addf %58, %59 : vector<2x16xf32>
    %61 = vector.extract_strided_slice %36 {offsets = [0, 0], sizes = [2, 32], strides = [1, 1]} : vector<2x48xf32> to vector<2x32xf32>
    %62 = vector.extract_strided_slice %40 {offsets = [0, 0], sizes = [2, 32], strides = [1, 1]} : vector<2x48xf32> to vector<2x32xf32>
    %63 = arith.addf %61, %62 : vector<2x32xf32>
    %64 = arith.negf %63 : vector<2x32xf32>
    %65 = math.exp %64 : vector<2x32xf32>
    %cst_21 = arith.constant 1.000000e+00 : f32
    %66 = vector.broadcast %cst_21 : f32 to vector<2x32xf32>
    %67 = arith.addf %66, %65 : vector<2x32xf32>
    %68 = arith.divf %66, %67 : vector<2x32xf32>
    %69 = vector.extract_strided_slice %68 {offsets = [0, 0], sizes = [2, 16], strides = [1, 1]} : vector<2x32xf32> to vector<2x16xf32>
    %70 = vector.extract_strided_slice %68 {offsets = [0, 16], sizes = [2, 16], strides = [1, 1]} : vector<2x32xf32> to vector<2x16xf32>
    %71 = vector.extract_strided_slice %36 {offsets = [0, 32], sizes = [2, 16], strides = [1, 1]} : vector<2x48xf32> to vector<2x16xf32>
    %72 = vector.extract_strided_slice %40 {offsets = [0, 32], sizes = [2, 16], strides = [1, 1]} : vector<2x48xf32> to vector<2x16xf32>
    %73 = arith.mulf %69, %72 : vector<2x16xf32>
    %74 = arith.addf %71, %73 : vector<2x16xf32>
    %75 = math.tanh %74 : vector<2x16xf32>
    %cst_22 = arith.constant 1.000000e+00 : f32
    %76 = vector.broadcast %cst_22 : f32 to vector<2x16xf32>
    %77 = arith.subf %76, %70 : vector<2x16xf32>
    %78 = arith.mulf %77, %75 : vector<2x16xf32>
    %79 = arith.mulf %70, %20 : vector<2x16xf32>
    %80 = arith.addf %78, %79 : vector<2x16xf32>
    %81 = arith.index_cast %21 : i32 to index
    %c0_23 = arith.constant 0 : index
    %82 = vector.load %arg5[%81, %c0_23] : memref<16x32xf32, #tpu.memory_space<vmem>>, vector<2x16xf32>
    tpu.vector_store %arg5[%81, %c0_23], %60 {strides = array<i32>} : memref<16x32xf32, #tpu.memory_space<vmem>>, vector<2x16xf32>,
    %83 = arith.index_cast %23 : i32 to index
    %c16 = arith.constant 16 : index
    %84 = vector.load %arg5[%83, %c16] : memref<16x32xf32, #tpu.memory_space<vmem>>, vector<2x16xf32>
    tpu.vector_store %arg5[%83, %c16], %80 {strides = array<i32>} : memref<16x32xf32, #tpu.memory_space<vmem>>, vector<2x16xf32>,
    %c1_i32 = arith.constant 1 : i32
    %c2_i32_24 = arith.constant 2 : i32
    %85 = arith.muli %c1_i32, %c2_i32_24 : i32
    %c7_i32_25 = arith.constant 7 : i32
    %86 = arith.subi %c7_i32_25, %c1_i32 : i32
    %c2_i32_26 = arith.constant 2 : i32
    %87 = arith.muli %86, %c2_i32_26 : i32
    %88 = arith.index_cast %85 : i32 to index
    %c0_27 = arith.constant 0 : index
    %89 = vector.load %arg6[%88, %c0_27] : memref<16x96xf32, #tpu.memory_space<vmem>>, vector<2x48xf32>
    %90 = arith.index_cast %87 : i32 to index
    %c48_28 = arith.constant 48 : index
    %91 = vector.load %arg6[%90, %c48_28] : memref<16x96xf32, #tpu.memory_space<vmem>>, vector<2x48xf32>
    %92 = arith.index_cast %c1_i32 : i32 to index
    %c0_29 = arith.constant 0 : index
    %93 = vector.load %arg2[%92, %c0_29] : memref<8x96xf32, #tpu.memory_space<vmem>>, vector<1x48xf32>
    %94 = vector.broadcast %93 : vector<1x48xf32> to vector<2x48xf32>
    %95 = arith.addf %89, %94 : vector<2x48xf32>
    %c7_i32_30 = arith.constant 7 : i32
    %96 = arith.subi %c7_i32_30, %c1_i32 : i32
    %97 = arith.index_cast %96 : i32 to index
    %c48_31 = arith.constant 48 : index
    %98 = vector.load %arg2[%97, %c48_31] : memref<8x96xf32, #tpu.memory_space<vmem>>, vector<1x48xf32>
    %99 = vector.broadcast %98 : vector<1x48xf32> to vector<2x48xf32>
    %100 = arith.addf %91, %99 : vector<2x48xf32>
    %cst_32 = arith.constant dense<0.000000e+00> : vector<2x48xf32>
    %101 = tpu.matmul %60, %11, %cst_32 {dimension_numbers = #tpu.dot_dimension_numbers<[1], [0], [0], [1], [0, 0, 1, 1], [], []>} : vector<2x16xf32>, vector<16x48xf32>, vector<2x48xf32> -> vector<2x48xf32>
    %102 = arith.addf %101, %16 : vector<2x48xf32>
    %cst_33 = arith.constant dense<0.000000e+00> : vector<2x48xf32>
    %103 = tpu.matmul %80, %12, %cst_33 {dimension_numbers = #tpu.dot_dimension_numbers<[1], [0], [0], [1], [0, 0, 1, 1], [], []>} : vector<2x16xf32>, vector<16x48xf32>, vector<2x48xf32> -> vector<2x48xf32>
    %104 = arith.addf %103, %19 : vector<2x48xf32>
    %105 = vector.extract_strided_slice %95 {offsets = [0, 0], sizes = [2, 32], strides = [1, 1]} : vector<2x48xf32> to vector<2x32xf32>
    %106 = vector.extract_strided_slice %102 {offsets = [0, 0], sizes = [2, 32], strides = [1, 1]} : vector<2x48xf32> to vector<2x32xf32>
    %107 = arith.addf %105, %106 : vector<2x32xf32>
    %108 = arith.negf %107 : vector<2x32xf32>
    %109 = math.exp %108 : vector<2x32xf32>
    %cst_34 = arith.constant 1.000000e+00 : f32
    %110 = vector.broadcast %cst_34 : f32 to vector<2x32xf32>
    %111 = arith.addf %110, %109 : vector<2x32xf32>
    %112 = arith.divf %110, %111 : vector<2x32xf32>
    %113 = vector.extract_strided_slice %112 {offsets = [0, 0], sizes = [2, 16], strides = [1, 1]} : vector<2x32xf32> to vector<2x16xf32>
    %114 = vector.extract_strided_slice %112 {offsets = [0, 16], sizes = [2, 16], strides = [1, 1]} : vector<2x32xf32> to vector<2x16xf32>
    %115 = vector.extract_strided_slice %95 {offsets = [0, 32], sizes = [2, 16], strides = [1, 1]} : vector<2x48xf32> to vector<2x16xf32>
    %116 = vector.extract_strided_slice %102 {offsets = [0, 32], sizes = [2, 16], strides = [1, 1]} : vector<2x48xf32> to vector<2x16xf32>
    %117 = arith.mulf %113, %116 : vector<2x16xf32>
    %118 = arith.addf %115, %117 : vector<2x16xf32>
    %119 = math.tanh %118 : vector<2x16xf32>
    %cst_35 = arith.constant 1.000000e+00 : f32
    %120 = vector.broadcast %cst_35 : f32 to vector<2x16xf32>
    %121 = arith.subf %120, %114 : vector<2x16xf32>
    %122 = arith.mulf %121, %119 : vector<2x16xf32>
    %123 = arith.mulf %114, %60 : vector<2x16xf32>
    %124 = arith.addf %122, %123 : vector<2x16xf32>
    %125 = vector.extract_strided_slice %100 {offsets = [0, 0], sizes = [2, 32], strides = [1, 1]} : vector<2x48xf32> to vector<2x32xf32>
    %126 = vector.extract_strided_slice %104 {offsets = [0, 0], sizes = [2, 32], strides = [1, 1]} : vector<2x48xf32> to vector<2x32xf32>
    %127 = arith.addf %125, %126 : vector<2x32xf32>
    %128 = arith.negf %127 : vector<2x32xf32>
    %129 = math.exp %128 : vector<2x32xf32>
    %cst_36 = arith.constant 1.000000e+00 : f32
    %130 = vector.broadcast %cst_36 : f32 to vector<2x32xf32>
    %131 = arith.addf %130, %129 : vector<2x32xf32>
    %132 = arith.divf %130, %131 : vector<2x32xf32>
    %133 = vector.extract_strided_slice %132 {offsets = [0, 0], sizes = [2, 16], strides = [1, 1]} : vector<2x32xf32> to vector<2x16xf32>
    %134 = vector.extract_strided_slice %132 {offsets = [0, 16], sizes = [2, 16], strides = [1, 1]} : vector<2x32xf32> to vector<2x16xf32>
    %135 = vector.extract_strided_slice %100 {offsets = [0, 32], sizes = [2, 16], strides = [1, 1]} : vector<2x48xf32> to vector<2x16xf32>
    %136 = vector.extract_strided_slice %104 {offsets = [0, 32], sizes = [2, 16], strides = [1, 1]} : vector<2x48xf32> to vector<2x16xf32>
    %137 = arith.mulf %133, %136 : vector<2x16xf32>
    %138 = arith.addf %135, %137 : vector<2x16xf32>
    %139 = math.tanh %138 : vector<2x16xf32>
    %cst_37 = arith.constant 1.000000e+00 : f32
    %140 = vector.broadcast %cst_37 : f32 to vector<2x16xf32>
    %141 = arith.subf %140, %134 : vector<2x16xf32>
    %142 = arith.mulf %141, %139 : vector<2x16xf32>
    %143 = arith.mulf %134, %80 : vector<2x16xf32>
    %144 = arith.addf %142, %143 : vector<2x16xf32>
    %145 = arith.index_cast %85 : i32 to index
    %c0_38 = arith.constant 0 : index
    %146 = vector.load %arg5[%145, %c0_38] : memref<16x32xf32, #tpu.memory_space<vmem>>, vector<2x16xf32>
    tpu.vector_store %arg5[%145, %c0_38], %124 {strides = array<i32>} : memref<16x32xf32, #tpu.memory_space<vmem>>, vector<2x16xf32>,
    %147 = arith.index_cast %87 : i32 to index
    %c16_39 = arith.constant 16 : index
    %148 = vector.load %arg5[%147, %c16_39] : memref<16x32xf32, #tpu.memory_space<vmem>>, vector<2x16xf32>
    tpu.vector_store %arg5[%147, %c16_39], %144 {strides = array<i32>} : memref<16x32xf32, #tpu.memory_space<vmem>>, vector<2x16xf32>,
    %c2_i32_40 = arith.constant 2 : i32
    %c2_i32_41 = arith.constant 2 : i32
    %149 = arith.muli %c2_i32_40, %c2_i32_41 : i32
    %c7_i32_42 = arith.constant 7 : i32
    %150 = arith.subi %c7_i32_42, %c2_i32_40 : i32
    %c2_i32_43 = arith.constant 2 : i32
    %151 = arith.muli %150, %c2_i32_43 : i32
    %152 = arith.index_cast %149 : i32 to index
    %c0_44 = arith.constant 0 : index
    %153 = vector.load %arg6[%152, %c0_44] : memref<16x96xf32, #tpu.memory_space<vmem>>, vector<2x48xf32>
    %154 = arith.index_cast %151 : i32 to index
    %c48_45 = arith.constant 48 : index
    %155 = vector.load %arg6[%154, %c48_45] : memref<16x96xf32, #tpu.memory_space<vmem>>, vector<2x48xf32>
    %156 = arith.index_cast %c2_i32_40 : i32 to index
    %c0_46 = arith.constant 0 : index
    %157 = vector.load %arg2[%156, %c0_46] : memref<8x96xf32, #tpu.memory_space<vmem>>, vector<1x48xf32>
    %158 = vector.broadcast %157 : vector<1x48xf32> to vector<2x48xf32>
    %159 = arith.addf %153, %158 : vector<2x48xf32>
    %c7_i32_47 = arith.constant 7 : i32
    %160 = arith.subi %c7_i32_47, %c2_i32_40 : i32
    %161 = arith.index_cast %160 : i32 to index
    %c48_48 = arith.constant 48 : index
    %162 = vector.load %arg2[%161, %c48_48] : memref<8x96xf32, #tpu.memory_space<vmem>>, vector<1x48xf32>
    %163 = vector.broadcast %162 : vector<1x48xf32> to vector<2x48xf32>
    %164 = arith.addf %155, %163 : vector<2x48xf32>
    %cst_49 = arith.constant dense<0.000000e+00> : vector<2x48xf32>
    %165 = tpu.matmul %124, %11, %cst_49 {dimension_numbers = #tpu.dot_dimension_numbers<[1], [0], [0], [1], [0, 0, 1, 1], [], []>} : vector<2x16xf32>, vector<16x48xf32>, vector<2x48xf32> -> vector<2x48xf32>
    %166 = arith.addf %165, %16 : vector<2x48xf32>
    %cst_50 = arith.constant dense<0.000000e+00> : vector<2x48xf32>
    %167 = tpu.matmul %144, %12, %cst_50 {dimension_numbers = #tpu.dot_dimension_numbers<[1], [0], [0], [1], [0, 0, 1, 1], [], []>} : vector<2x16xf32>, vector<16x48xf32>, vector<2x48xf32> -> vector<2x48xf32>
    %168 = arith.addf %167, %19 : vector<2x48xf32>
    %169 = vector.extract_strided_slice %159 {offsets = [0, 0], sizes = [2, 32], strides = [1, 1]} : vector<2x48xf32> to vector<2x32xf32>
    %170 = vector.extract_strided_slice %166 {offsets = [0, 0], sizes = [2, 32], strides = [1, 1]} : vector<2x48xf32> to vector<2x32xf32>
    %171 = arith.addf %169, %170 : vector<2x32xf32>
    %172 = arith.negf %171 : vector<2x32xf32>
    %173 = math.exp %172 : vector<2x32xf32>
    %cst_51 = arith.constant 1.000000e+00 : f32
    %174 = vector.broadcast %cst_51 : f32 to vector<2x32xf32>
    %175 = arith.addf %174, %173 : vector<2x32xf32>
    %176 = arith.divf %174, %175 : vector<2x32xf32>
    %177 = vector.extract_strided_slice %176 {offsets = [0, 0], sizes = [2, 16], strides = [1, 1]} : vector<2x32xf32> to vector<2x16xf32>
    %178 = vector.extract_strided_slice %176 {offsets = [0, 16], sizes = [2, 16], strides = [1, 1]} : vector<2x32xf32> to vector<2x16xf32>
    %179 = vector.extract_strided_slice %159 {offsets = [0, 32], sizes = [2, 16], strides = [1, 1]} : vector<2x48xf32> to vector<2x16xf32>
    %180 = vector.extract_strided_slice %166 {offsets = [0, 32], sizes = [2, 16], strides = [1, 1]} : vector<2x48xf32> to vector<2x16xf32>
    %181 = arith.mulf %177, %180 : vector<2x16xf32>
    %182 = arith.addf %179, %181 : vector<2x16xf32>
    %183 = math.tanh %182 : vector<2x16xf32>
    %cst_52 = arith.constant 1.000000e+00 : f32
    %184 = vector.broadcast %cst_52 : f32 to vector<2x16xf32>
    %185 = arith.subf %184, %178 : vector<2x16xf32>
    %186 = arith.mulf %185, %183 : vector<2x16xf32>
    %187 = arith.mulf %178, %124 : vector<2x16xf32>
    %188 = arith.addf %186, %187 : vector<2x16xf32>
    %189 = vector.extract_strided_slice %164 {offsets = [0, 0], sizes = [2, 32], strides = [1, 1]} : vector<2x48xf32> to vector<2x32xf32>
    %190 = vector.extract_strided_slice %168 {offsets = [0, 0], sizes = [2, 32], strides = [1, 1]} : vector<2x48xf32> to vector<2x32xf32>
    %191 = arith.addf %189, %190 : vector<2x32xf32>
    %192 = arith.negf %191 : vector<2x32xf32>
    %193 = math.exp %192 : vector<2x32xf32>
    %cst_53 = arith.constant 1.000000e+00 : f32
    %194 = vector.broadcast %cst_53 : f32 to vector<2x32xf32>
    %195 = arith.addf %194, %193 : vector<2x32xf32>
    %196 = arith.divf %194, %195 : vector<2x32xf32>
    %197 = vector.extract_strided_slice %196 {offsets = [0, 0], sizes = [2, 16], strides = [1, 1]} : vector<2x32xf32> to vector<2x16xf32>
    %198 = vector.extract_strided_slice %196 {offsets = [0, 16], sizes = [2, 16], strides = [1, 1]} : vector<2x32xf32> to vector<2x16xf32>
    %199 = vector.extract_strided_slice %164 {offsets = [0, 32], sizes = [2, 16], strides = [1, 1]} : vector<2x48xf32> to vector<2x16xf32>
    %200 = vector.extract_strided_slice %168 {offsets = [0, 32], sizes = [2, 16], strides = [1, 1]} : vector<2x48xf32> to vector<2x16xf32>
    %201 = arith.mulf %197, %200 : vector<2x16xf32>
    %202 = arith.addf %199, %201 : vector<2x16xf32>
    %203 = math.tanh %202 : vector<2x16xf32>
    %cst_54 = arith.constant 1.000000e+00 : f32
    %204 = vector.broadcast %cst_54 : f32 to vector<2x16xf32>
    %205 = arith.subf %204, %198 : vector<2x16xf32>
    %206 = arith.mulf %205, %203 : vector<2x16xf32>
    %207 = arith.mulf %198, %144 : vector<2x16xf32>
    %208 = arith.addf %206, %207 : vector<2x16xf32>
    %209 = arith.index_cast %149 : i32 to index
    %c0_55 = arith.constant 0 : index
    %210 = vector.load %arg5[%209, %c0_55] : memref<16x32xf32, #tpu.memory_space<vmem>>, vector<2x16xf32>
    tpu.vector_store %arg5[%209, %c0_55], %188 {strides = array<i32>} : memref<16x32xf32, #tpu.memory_space<vmem>>, vector<2x16xf32>,
    %211 = arith.index_cast %151 : i32 to index
    %c16_56 = arith.constant 16 : index
    %212 = vector.load %arg5[%211, %c16_56] : memref<16x32xf32, #tpu.memory_space<vmem>>, vector<2x16xf32>
    tpu.vector_store %arg5[%211, %c16_56], %208 {strides = array<i32>} : memref<16x32xf32, #tpu.memory_space<vmem>>, vector<2x16xf32>,
    %c3_i32 = arith.constant 3 : i32
    %c2_i32_57 = arith.constant 2 : i32
    %213 = arith.muli %c3_i32, %c2_i32_57 : i32
    %c7_i32_58 = arith.constant 7 : i32
    %214 = arith.subi %c7_i32_58, %c3_i32 : i32
    %c2_i32_59 = arith.constant 2 : i32
    %215 = arith.muli %214, %c2_i32_59 : i32
    %216 = arith.index_cast %213 : i32 to index
    %c0_60 = arith.constant 0 : index
    %217 = vector.load %arg6[%216, %c0_60] : memref<16x96xf32, #tpu.memory_space<vmem>>, vector<2x48xf32>
    %218 = arith.index_cast %215 : i32 to index
    %c48_61 = arith.constant 48 : index
    %219 = vector.load %arg6[%218, %c48_61] : memref<16x96xf32, #tpu.memory_space<vmem>>, vector<2x48xf32>
    %220 = arith.index_cast %c3_i32 : i32 to index
    %c0_62 = arith.constant 0 : index
    %221 = vector.load %arg2[%220, %c0_62] : memref<8x96xf32, #tpu.memory_space<vmem>>, vector<1x48xf32>
    %222 = vector.broadcast %221 : vector<1x48xf32> to vector<2x48xf32>
    %223 = arith.addf %217, %222 : vector<2x48xf32>
    %c7_i32_63 = arith.constant 7 : i32
    %224 = arith.subi %c7_i32_63, %c3_i32 : i32
    %225 = arith.index_cast %224 : i32 to index
    %c48_64 = arith.constant 48 : index
    %226 = vector.load %arg2[%225, %c48_64] : memref<8x96xf32, #tpu.memory_space<vmem>>, vector<1x48xf32>
    %227 = vector.broadcast %226 : vector<1x48xf32> to vector<2x48xf32>
    %228 = arith.addf %219, %227 : vector<2x48xf32>
    %cst_65 = arith.constant dense<0.000000e+00> : vector<2x48xf32>
    %229 = tpu.matmul %188, %11, %cst_65 {dimension_numbers = #tpu.dot_dimension_numbers<[1], [0], [0], [1], [0, 0, 1, 1], [], []>} : vector<2x16xf32>, vector<16x48xf32>, vector<2x48xf32> -> vector<2x48xf32>
    %230 = arith.addf %229, %16 : vector<2x48xf32>
    %cst_66 = arith.constant dense<0.000000e+00> : vector<2x48xf32>
    %231 = tpu.matmul %208, %12, %cst_66 {dimension_numbers = #tpu.dot_dimension_numbers<[1], [0], [0], [1], [0, 0, 1, 1], [], []>} : vector<2x16xf32>, vector<16x48xf32>, vector<2x48xf32> -> vector<2x48xf32>
    %232 = arith.addf %231, %19 : vector<2x48xf32>
    %233 = vector.extract_strided_slice %223 {offsets = [0, 0], sizes = [2, 32], strides = [1, 1]} : vector<2x48xf32> to vector<2x32xf32>
    %234 = vector.extract_strided_slice %230 {offsets = [0, 0], sizes = [2, 32], strides = [1, 1]} : vector<2x48xf32> to vector<2x32xf32>
    %235 = arith.addf %233, %234 : vector<2x32xf32>
    %236 = arith.negf %235 : vector<2x32xf32>
    %237 = math.exp %236 : vector<2x32xf32>
    %cst_67 = arith.constant 1.000000e+00 : f32
    %238 = vector.broadcast %cst_67 : f32 to vector<2x32xf32>
    %239 = arith.addf %238, %237 : vector<2x32xf32>
    %240 = arith.divf %238, %239 : vector<2x32xf32>
    %241 = vector.extract_strided_slice %240 {offsets = [0, 0], sizes = [2, 16], strides = [1, 1]} : vector<2x32xf32> to vector<2x16xf32>
    %242 = vector.extract_strided_slice %240 {offsets = [0, 16], sizes = [2, 16], strides = [1, 1]} : vector<2x32xf32> to vector<2x16xf32>
    %243 = vector.extract_strided_slice %223 {offsets = [0, 32], sizes = [2, 16], strides = [1, 1]} : vector<2x48xf32> to vector<2x16xf32>
    %244 = vector.extract_strided_slice %230 {offsets = [0, 32], sizes = [2, 16], strides = [1, 1]} : vector<2x48xf32> to vector<2x16xf32>
    %245 = arith.mulf %241, %244 : vector<2x16xf32>
    %246 = arith.addf %243, %245 : vector<2x16xf32>
    %247 = math.tanh %246 : vector<2x16xf32>
    %cst_68 = arith.constant 1.000000e+00 : f32
    %248 = vector.broadcast %cst_68 : f32 to vector<2x16xf32>
    %249 = arith.subf %248, %242 : vector<2x16xf32>
    %250 = arith.mulf %249, %247 : vector<2x16xf32>
    %251 = arith.mulf %242, %188 : vector<2x16xf32>
    %252 = arith.addf %250, %251 : vector<2x16xf32>
    %253 = vector.extract_strided_slice %228 {offsets = [0, 0], sizes = [2, 32], strides = [1, 1]} : vector<2x48xf32> to vector<2x32xf32>
    %254 = vector.extract_strided_slice %232 {offsets = [0, 0], sizes = [2, 32], strides = [1, 1]} : vector<2x48xf32> to vector<2x32xf32>
    %255 = arith.addf %253, %254 : vector<2x32xf32>
    %256 = arith.negf %255 : vector<2x32xf32>
    %257 = math.exp %256 : vector<2x32xf32>
    %cst_69 = arith.constant 1.000000e+00 : f32
    %258 = vector.broadcast %cst_69 : f32 to vector<2x32xf32>
    %259 = arith.addf %258, %257 : vector<2x32xf32>
    %260 = arith.divf %258, %259 : vector<2x32xf32>
    %261 = vector.extract_strided_slice %260 {offsets = [0, 0], sizes = [2, 16], strides = [1, 1]} : vector<2x32xf32> to vector<2x16xf32>
    %262 = vector.extract_strided_slice %260 {offsets = [0, 16], sizes = [2, 16], strides = [1, 1]} : vector<2x32xf32> to vector<2x16xf32>
    %263 = vector.extract_strided_slice %228 {offsets = [0, 32], sizes = [2, 16], strides = [1, 1]} : vector<2x48xf32> to vector<2x16xf32>
    %264 = vector.extract_strided_slice %232 {offsets = [0, 32], sizes = [2, 16], strides = [1, 1]} : vector<2x48xf32> to vector<2x16xf32>
    %265 = arith.mulf %261, %264 : vector<2x16xf32>
    %266 = arith.addf %263, %265 : vector<2x16xf32>
    %267 = math.tanh %266 : vector<2x16xf32>
    %cst_70 = arith.constant 1.000000e+00 : f32
    %268 = vector.broadcast %cst_70 : f32 to vector<2x16xf32>
    %269 = arith.subf %268, %262 : vector<2x16xf32>
    %270 = arith.mulf %269, %267 : vector<2x16xf32>
    %271 = arith.mulf %262, %208 : vector<2x16xf32>
    %272 = arith.addf %270, %271 : vector<2x16xf32>
    %273 = arith.index_cast %213 : i32 to index
    %c0_71 = arith.constant 0 : index
    %274 = vector.load %arg5[%273, %c0_71] : memref<16x32xf32, #tpu.memory_space<vmem>>, vector<2x16xf32>
    tpu.vector_store %arg5[%273, %c0_71], %252 {strides = array<i32>} : memref<16x32xf32, #tpu.memory_space<vmem>>, vector<2x16xf32>,
    %275 = arith.index_cast %215 : i32 to index
    %c16_72 = arith.constant 16 : index
    %276 = vector.load %arg5[%275, %c16_72] : memref<16x32xf32, #tpu.memory_space<vmem>>, vector<2x16xf32>
    tpu.vector_store %arg5[%275, %c16_72], %272 {strides = array<i32>} : memref<16x32xf32, #tpu.memory_space<vmem>>, vector<2x16xf32>,
    %c4_i32 = arith.constant 4 : i32
    %c2_i32_73 = arith.constant 2 : i32
    %277 = arith.muli %c4_i32, %c2_i32_73 : i32
    %c7_i32_74 = arith.constant 7 : i32
    %278 = arith.subi %c7_i32_74, %c4_i32 : i32
    %c2_i32_75 = arith.constant 2 : i32
    %279 = arith.muli %278, %c2_i32_75 : i32
    %280 = arith.index_cast %277 : i32 to index
    %c0_76 = arith.constant 0 : index
    %281 = vector.load %arg6[%280, %c0_76] : memref<16x96xf32, #tpu.memory_space<vmem>>, vector<2x48xf32>
    %282 = arith.index_cast %279 : i32 to index
    %c48_77 = arith.constant 48 : index
    %283 = vector.load %arg6[%282, %c48_77] : memref<16x96xf32, #tpu.memory_space<vmem>>, vector<2x48xf32>
    %284 = arith.index_cast %c4_i32 : i32 to index
    %c0_78 = arith.constant 0 : index
    %285 = vector.load %arg2[%284, %c0_78] : memref<8x96xf32, #tpu.memory_space<vmem>>, vector<1x48xf32>
    %286 = vector.broadcast %285 : vector<1x48xf32> to vector<2x48xf32>
    %287 = arith.addf %281, %286 : vector<2x48xf32>
    %c7_i32_79 = arith.constant 7 : i32
    %288 = arith.subi %c7_i32_79, %c4_i32 : i32
    %289 = arith.index_cast %288 : i32 to index
    %c48_80 = arith.constant 48 : index
    %290 = vector.load %arg2[%289, %c48_80] : memref<8x96xf32, #tpu.memory_space<vmem>>, vector<1x48xf32>
    %291 = vector.broadcast %290 : vector<1x48xf32> to vector<2x48xf32>
    %292 = arith.addf %283, %291 : vector<2x48xf32>
    %cst_81 = arith.constant dense<0.000000e+00> : vector<2x48xf32>
    %293 = tpu.matmul %252, %11, %cst_81 {dimension_numbers = #tpu.dot_dimension_numbers<[1], [0], [0], [1], [0, 0, 1, 1], [], []>} : vector<2x16xf32>, vector<16x48xf32>, vector<2x48xf32> -> vector<2x48xf32>
    %294 = arith.addf %293, %16 : vector<2x48xf32>
    %cst_82 = arith.constant dense<0.000000e+00> : vector<2x48xf32>
    %295 = tpu.matmul %272, %12, %cst_82 {dimension_numbers = #tpu.dot_dimension_numbers<[1], [0], [0], [1], [0, 0, 1, 1], [], []>} : vector<2x16xf32>, vector<16x48xf32>, vector<2x48xf32> -> vector<2x48xf32>
    %296 = arith.addf %295, %19 : vector<2x48xf32>
    %297 = vector.extract_strided_slice %287 {offsets = [0, 0], sizes = [2, 32], strides = [1, 1]} : vector<2x48xf32> to vector<2x32xf32>
    %298 = vector.extract_strided_slice %294 {offsets = [0, 0], sizes = [2, 32], strides = [1, 1]} : vector<2x48xf32> to vector<2x32xf32>
    %299 = arith.addf %297, %298 : vector<2x32xf32>
    %300 = arith.negf %299 : vector<2x32xf32>
    %301 = math.exp %300 : vector<2x32xf32>
    %cst_83 = arith.constant 1.000000e+00 : f32
    %302 = vector.broadcast %cst_83 : f32 to vector<2x32xf32>
    %303 = arith.addf %302, %301 : vector<2x32xf32>
    %304 = arith.divf %302, %303 : vector<2x32xf32>
    %305 = vector.extract_strided_slice %304 {offsets = [0, 0], sizes = [2, 16], strides = [1, 1]} : vector<2x32xf32> to vector<2x16xf32>
    %306 = vector.extract_strided_slice %304 {offsets = [0, 16], sizes = [2, 16], strides = [1, 1]} : vector<2x32xf32> to vector<2x16xf32>
    %307 = vector.extract_strided_slice %287 {offsets = [0, 32], sizes = [2, 16], strides = [1, 1]} : vector<2x48xf32> to vector<2x16xf32>
    %308 = vector.extract_strided_slice %294 {offsets = [0, 32], sizes = [2, 16], strides = [1, 1]} : vector<2x48xf32> to vector<2x16xf32>
    %309 = arith.mulf %305, %308 : vector<2x16xf32>
    %310 = arith.addf %307, %309 : vector<2x16xf32>
    %311 = math.tanh %310 : vector<2x16xf32>
    %cst_84 = arith.constant 1.000000e+00 : f32
    %312 = vector.broadcast %cst_84 : f32 to vector<2x16xf32>
    %313 = arith.subf %312, %306 : vector<2x16xf32>
    %314 = arith.mulf %313, %311 : vector<2x16xf32>
    %315 = arith.mulf %306, %252 : vector<2x16xf32>
    %316 = arith.addf %314, %315 : vector<2x16xf32>
    %317 = vector.extract_strided_slice %292 {offsets = [0, 0], sizes = [2, 32], strides = [1, 1]} : vector<2x48xf32> to vector<2x32xf32>
    %318 = vector.extract_strided_slice %296 {offsets = [0, 0], sizes = [2, 32], strides = [1, 1]} : vector<2x48xf32> to vector<2x32xf32>
    %319 = arith.addf %317, %318 : vector<2x32xf32>
    %320 = arith.negf %319 : vector<2x32xf32>
    %321 = math.exp %320 : vector<2x32xf32>
    %cst_85 = arith.constant 1.000000e+00 : f32
    %322 = vector.broadcast %cst_85 : f32 to vector<2x32xf32>
    %323 = arith.addf %322, %321 : vector<2x32xf32>
    %324 = arith.divf %322, %323 : vector<2x32xf32>
    %325 = vector.extract_strided_slice %324 {offsets = [0, 0], sizes = [2, 16], strides = [1, 1]} : vector<2x32xf32> to vector<2x16xf32>
    %326 = vector.extract_strided_slice %324 {offsets = [0, 16], sizes = [2, 16], strides = [1, 1]} : vector<2x32xf32> to vector<2x16xf32>
    %327 = vector.extract_strided_slice %292 {offsets = [0, 32], sizes = [2, 16], strides = [1, 1]} : vector<2x48xf32> to vector<2x16xf32>
    %328 = vector.extract_strided_slice %296 {offsets = [0, 32], sizes = [2, 16], strides = [1, 1]} : vector<2x48xf32> to vector<2x16xf32>
    %329 = arith.mulf %325, %328 : vector<2x16xf32>
    %330 = arith.addf %327, %329 : vector<2x16xf32>
    %331 = math.tanh %330 : vector<2x16xf32>
    %cst_86 = arith.constant 1.000000e+00 : f32
    %332 = vector.broadcast %cst_86 : f32 to vector<2x16xf32>
    %333 = arith.subf %332, %326 : vector<2x16xf32>
    %334 = arith.mulf %333, %331 : vector<2x16xf32>
    %335 = arith.mulf %326, %272 : vector<2x16xf32>
    %336 = arith.addf %334, %335 : vector<2x16xf32>
    %337 = arith.index_cast %277 : i32 to index
    %c0_87 = arith.constant 0 : index
    %338 = vector.load %arg5[%337, %c0_87] : memref<16x32xf32, #tpu.memory_space<vmem>>, vector<2x16xf32>
    tpu.vector_store %arg5[%337, %c0_87], %316 {strides = array<i32>} : memref<16x32xf32, #tpu.memory_space<vmem>>, vector<2x16xf32>,
    %339 = arith.index_cast %279 : i32 to index
    %c16_88 = arith.constant 16 : index
    %340 = vector.load %arg5[%339, %c16_88] : memref<16x32xf32, #tpu.memory_space<vmem>>, vector<2x16xf32>
    tpu.vector_store %arg5[%339, %c16_88], %336 {strides = array<i32>} : memref<16x32xf32, #tpu.memory_space<vmem>>, vector<2x16xf32>,
    %c5_i32 = arith.constant 5 : i32
    %c2_i32_89 = arith.constant 2 : i32
    %341 = arith.muli %c5_i32, %c2_i32_89 : i32
    %c7_i32_90 = arith.constant 7 : i32
    %342 = arith.subi %c7_i32_90, %c5_i32 : i32
    %c2_i32_91 = arith.constant 2 : i32
    %343 = arith.muli %342, %c2_i32_91 : i32
    %344 = arith.index_cast %341 : i32 to index
    %c0_92 = arith.constant 0 : index
    %345 = vector.load %arg6[%344, %c0_92] : memref<16x96xf32, #tpu.memory_space<vmem>>, vector<2x48xf32>
    %346 = arith.index_cast %343 : i32 to index
    %c48_93 = arith.constant 48 : index
    %347 = vector.load %arg6[%346, %c48_93] : memref<16x96xf32, #tpu.memory_space<vmem>>, vector<2x48xf32>
    %348 = arith.index_cast %c5_i32 : i32 to index
    %c0_94 = arith.constant 0 : index
    %349 = vector.load %arg2[%348, %c0_94] : memref<8x96xf32, #tpu.memory_space<vmem>>, vector<1x48xf32>
    %350 = vector.broadcast %349 : vector<1x48xf32> to vector<2x48xf32>
    %351 = arith.addf %345, %350 : vector<2x48xf32>
    %c7_i32_95 = arith.constant 7 : i32
    %352 = arith.subi %c7_i32_95, %c5_i32 : i32
    %353 = arith.index_cast %352 : i32 to index
    %c48_96 = arith.constant 48 : index
    %354 = vector.load %arg2[%353, %c48_96] : memref<8x96xf32, #tpu.memory_space<vmem>>, vector<1x48xf32>
    %355 = vector.broadcast %354 : vector<1x48xf32> to vector<2x48xf32>
    %356 = arith.addf %347, %355 : vector<2x48xf32>
    %cst_97 = arith.constant dense<0.000000e+00> : vector<2x48xf32>
    %357 = tpu.matmul %316, %11, %cst_97 {dimension_numbers = #tpu.dot_dimension_numbers<[1], [0], [0], [1], [0, 0, 1, 1], [], []>} : vector<2x16xf32>, vector<16x48xf32>, vector<2x48xf32> -> vector<2x48xf32>
    %358 = arith.addf %357, %16 : vector<2x48xf32>
    %cst_98 = arith.constant dense<0.000000e+00> : vector<2x48xf32>
    %359 = tpu.matmul %336, %12, %cst_98 {dimension_numbers = #tpu.dot_dimension_numbers<[1], [0], [0], [1], [0, 0, 1, 1], [], []>} : vector<2x16xf32>, vector<16x48xf32>, vector<2x48xf32> -> vector<2x48xf32>
    %360 = arith.addf %359, %19 : vector<2x48xf32>
    %361 = vector.extract_strided_slice %351 {offsets = [0, 0], sizes = [2, 32], strides = [1, 1]} : vector<2x48xf32> to vector<2x32xf32>
    %362 = vector.extract_strided_slice %358 {offsets = [0, 0], sizes = [2, 32], strides = [1, 1]} : vector<2x48xf32> to vector<2x32xf32>
    %363 = arith.addf %361, %362 : vector<2x32xf32>
    %364 = arith.negf %363 : vector<2x32xf32>
    %365 = math.exp %364 : vector<2x32xf32>
    %cst_99 = arith.constant 1.000000e+00 : f32
    %366 = vector.broadcast %cst_99 : f32 to vector<2x32xf32>
    %367 = arith.addf %366, %365 : vector<2x32xf32>
    %368 = arith.divf %366, %367 : vector<2x32xf32>
    %369 = vector.extract_strided_slice %368 {offsets = [0, 0], sizes = [2, 16], strides = [1, 1]} : vector<2x32xf32> to vector<2x16xf32>
    %370 = vector.extract_strided_slice %368 {offsets = [0, 16], sizes = [2, 16], strides = [1, 1]} : vector<2x32xf32> to vector<2x16xf32>
    %371 = vector.extract_strided_slice %351 {offsets = [0, 32], sizes = [2, 16], strides = [1, 1]} : vector<2x48xf32> to vector<2x16xf32>
    %372 = vector.extract_strided_slice %358 {offsets = [0, 32], sizes = [2, 16], strides = [1, 1]} : vector<2x48xf32> to vector<2x16xf32>
    %373 = arith.mulf %369, %372 : vector<2x16xf32>
    %374 = arith.addf %371, %373 : vector<2x16xf32>
    %375 = math.tanh %374 : vector<2x16xf32>
    %cst_100 = arith.constant 1.000000e+00 : f32
    %376 = vector.broadcast %cst_100 : f32 to vector<2x16xf32>
    %377 = arith.subf %376, %370 : vector<2x16xf32>
    %378 = arith.mulf %377, %375 : vector<2x16xf32>
    %379 = arith.mulf %370, %316 : vector<2x16xf32>
    %380 = arith.addf %378, %379 : vector<2x16xf32>
    %381 = vector.extract_strided_slice %356 {offsets = [0, 0], sizes = [2, 32], strides = [1, 1]} : vector<2x48xf32> to vector<2x32xf32>
    %382 = vector.extract_strided_slice %360 {offsets = [0, 0], sizes = [2, 32], strides = [1, 1]} : vector<2x48xf32> to vector<2x32xf32>
    %383 = arith.addf %381, %382 : vector<2x32xf32>
    %384 = arith.negf %383 : vector<2x32xf32>
    %385 = math.exp %384 : vector<2x32xf32>
    %cst_101 = arith.constant 1.000000e+00 : f32
    %386 = vector.broadcast %cst_101 : f32 to vector<2x32xf32>
    %387 = arith.addf %386, %385 : vector<2x32xf32>
    %388 = arith.divf %386, %387 : vector<2x32xf32>
    %389 = vector.extract_strided_slice %388 {offsets = [0, 0], sizes = [2, 16], strides = [1, 1]} : vector<2x32xf32> to vector<2x16xf32>
    %390 = vector.extract_strided_slice %388 {offsets = [0, 16], sizes = [2, 16], strides = [1, 1]} : vector<2x32xf32> to vector<2x16xf32>
    %391 = vector.extract_strided_slice %356 {offsets = [0, 32], sizes = [2, 16], strides = [1, 1]} : vector<2x48xf32> to vector<2x16xf32>
    %392 = vector.extract_strided_slice %360 {offsets = [0, 32], sizes = [2, 16], strides = [1, 1]} : vector<2x48xf32> to vector<2x16xf32>
    %393 = arith.mulf %389, %392 : vector<2x16xf32>
    %394 = arith.addf %391, %393 : vector<2x16xf32>
    %395 = math.tanh %394 : vector<2x16xf32>
    %cst_102 = arith.constant 1.000000e+00 : f32
    %396 = vector.broadcast %cst_102 : f32 to vector<2x16xf32>
    %397 = arith.subf %396, %390 : vector<2x16xf32>
    %398 = arith.mulf %397, %395 : vector<2x16xf32>
    %399 = arith.mulf %390, %336 : vector<2x16xf32>
    %400 = arith.addf %398, %399 : vector<2x16xf32>
    %401 = arith.index_cast %341 : i32 to index
    %c0_103 = arith.constant 0 : index
    %402 = vector.load %arg5[%401, %c0_103] : memref<16x32xf32, #tpu.memory_space<vmem>>, vector<2x16xf32>
    tpu.vector_store %arg5[%401, %c0_103], %380 {strides = array<i32>} : memref<16x32xf32, #tpu.memory_space<vmem>>, vector<2x16xf32>,
    %403 = arith.index_cast %343 : i32 to index
    %c16_104 = arith.constant 16 : index
    %404 = vector.load %arg5[%403, %c16_104] : memref<16x32xf32, #tpu.memory_space<vmem>>, vector<2x16xf32>
    tpu.vector_store %arg5[%403, %c16_104], %400 {strides = array<i32>} : memref<16x32xf32, #tpu.memory_space<vmem>>, vector<2x16xf32>,
    %c6_i32 = arith.constant 6 : i32
    %c2_i32_105 = arith.constant 2 : i32
    %405 = arith.muli %c6_i32, %c2_i32_105 : i32
    %c7_i32_106 = arith.constant 7 : i32
    %406 = arith.subi %c7_i32_106, %c6_i32 : i32
    %c2_i32_107 = arith.constant 2 : i32
    %407 = arith.muli %406, %c2_i32_107 : i32
    %408 = arith.index_cast %405 : i32 to index
    %c0_108 = arith.constant 0 : index
    %409 = vector.load %arg6[%408, %c0_108] : memref<16x96xf32, #tpu.memory_space<vmem>>, vector<2x48xf32>
    %410 = arith.index_cast %407 : i32 to index
    %c48_109 = arith.constant 48 : index
    %411 = vector.load %arg6[%410, %c48_109] : memref<16x96xf32, #tpu.memory_space<vmem>>, vector<2x48xf32>
    %412 = arith.index_cast %c6_i32 : i32 to index
    %c0_110 = arith.constant 0 : index
    %413 = vector.load %arg2[%412, %c0_110] : memref<8x96xf32, #tpu.memory_space<vmem>>, vector<1x48xf32>
    %414 = vector.broadcast %413 : vector<1x48xf32> to vector<2x48xf32>
    %415 = arith.addf %409, %414 : vector<2x48xf32>
    %c7_i32_111 = arith.constant 7 : i32
    %416 = arith.subi %c7_i32_111, %c6_i32 : i32
    %417 = arith.index_cast %416 : i32 to index
    %c48_112 = arith.constant 48 : index
    %418 = vector.load %arg2[%417, %c48_112] : memref<8x96xf32, #tpu.memory_space<vmem>>, vector<1x48xf32>
    %419 = vector.broadcast %418 : vector<1x48xf32> to vector<2x48xf32>
    %420 = arith.addf %411, %419 : vector<2x48xf32>
    %cst_113 = arith.constant dense<0.000000e+00> : vector<2x48xf32>
    %421 = tpu.matmul %380, %11, %cst_113 {dimension_numbers = #tpu.dot_dimension_numbers<[1], [0], [0], [1], [0, 0, 1, 1], [], []>} : vector<2x16xf32>, vector<16x48xf32>, vector<2x48xf32> -> vector<2x48xf32>
    %422 = arith.addf %421, %16 : vector<2x48xf32>
    %cst_114 = arith.constant dense<0.000000e+00> : vector<2x48xf32>
    %423 = tpu.matmul %400, %12, %cst_114 {dimension_numbers = #tpu.dot_dimension_numbers<[1], [0], [0], [1], [0, 0, 1, 1], [], []>} : vector<2x16xf32>, vector<16x48xf32>, vector<2x48xf32> -> vector<2x48xf32>
    %424 = arith.addf %423, %19 : vector<2x48xf32>
    %425 = vector.extract_strided_slice %415 {offsets = [0, 0], sizes = [2, 32], strides = [1, 1]} : vector<2x48xf32> to vector<2x32xf32>
    %426 = vector.extract_strided_slice %422 {offsets = [0, 0], sizes = [2, 32], strides = [1, 1]} : vector<2x48xf32> to vector<2x32xf32>
    %427 = arith.addf %425, %426 : vector<2x32xf32>
    %428 = arith.negf %427 : vector<2x32xf32>
    %429 = math.exp %428 : vector<2x32xf32>
    %cst_115 = arith.constant 1.000000e+00 : f32
    %430 = vector.broadcast %cst_115 : f32 to vector<2x32xf32>
    %431 = arith.addf %430, %429 : vector<2x32xf32>
    %432 = arith.divf %430, %431 : vector<2x32xf32>
    %433 = vector.extract_strided_slice %432 {offsets = [0, 0], sizes = [2, 16], strides = [1, 1]} : vector<2x32xf32> to vector<2x16xf32>
    %434 = vector.extract_strided_slice %432 {offsets = [0, 16], sizes = [2, 16], strides = [1, 1]} : vector<2x32xf32> to vector<2x16xf32>
    %435 = vector.extract_strided_slice %415 {offsets = [0, 32], sizes = [2, 16], strides = [1, 1]} : vector<2x48xf32> to vector<2x16xf32>
    %436 = vector.extract_strided_slice %422 {offsets = [0, 32], sizes = [2, 16], strides = [1, 1]} : vector<2x48xf32> to vector<2x16xf32>
    %437 = arith.mulf %433, %436 : vector<2x16xf32>
    %438 = arith.addf %435, %437 : vector<2x16xf32>
    %439 = math.tanh %438 : vector<2x16xf32>
    %cst_116 = arith.constant 1.000000e+00 : f32
    %440 = vector.broadcast %cst_116 : f32 to vector<2x16xf32>
    %441 = arith.subf %440, %434 : vector<2x16xf32>
    %442 = arith.mulf %441, %439 : vector<2x16xf32>
    %443 = arith.mulf %434, %380 : vector<2x16xf32>
    %444 = arith.addf %442, %443 : vector<2x16xf32>
    %445 = vector.extract_strided_slice %420 {offsets = [0, 0], sizes = [2, 32], strides = [1, 1]} : vector<2x48xf32> to vector<2x32xf32>
    %446 = vector.extract_strided_slice %424 {offsets = [0, 0], sizes = [2, 32], strides = [1, 1]} : vector<2x48xf32> to vector<2x32xf32>
    %447 = arith.addf %445, %446 : vector<2x32xf32>
    %448 = arith.negf %447 : vector<2x32xf32>
    %449 = math.exp %448 : vector<2x32xf32>
    %cst_117 = arith.constant 1.000000e+00 : f32
    %450 = vector.broadcast %cst_117 : f32 to vector<2x32xf32>
    %451 = arith.addf %450, %449 : vector<2x32xf32>
    %452 = arith.divf %450, %451 : vector<2x32xf32>
    %453 = vector.extract_strided_slice %452 {offsets = [0, 0], sizes = [2, 16], strides = [1, 1]} : vector<2x32xf32> to vector<2x16xf32>
    %454 = vector.extract_strided_slice %452 {offsets = [0, 16], sizes = [2, 16], strides = [1, 1]} : vector<2x32xf32> to vector<2x16xf32>
    %455 = vector.extract_strided_slice %420 {offsets = [0, 32], sizes = [2, 16], strides = [1, 1]} : vector<2x48xf32> to vector<2x16xf32>
    %456 = vector.extract_strided_slice %424 {offsets = [0, 32], sizes = [2, 16], strides = [1, 1]} : vector<2x48xf32> to vector<2x16xf32>
    %457 = arith.mulf %453, %456 : vector<2x16xf32>
    %458 = arith.addf %455, %457 : vector<2x16xf32>
    %459 = math.tanh %458 : vector<2x16xf32>
    %cst_118 = arith.constant 1.000000e+00 : f32
    %460 = vector.broadcast %cst_118 : f32 to vector<2x16xf32>
    %461 = arith.subf %460, %454 : vector<2x16xf32>
    %462 = arith.mulf %461, %459 : vector<2x16xf32>
    %463 = arith.mulf %454, %400 : vector<2x16xf32>
    %464 = arith.addf %462, %463 : vector<2x16xf32>
    %465 = arith.index_cast %405 : i32 to index
    %c0_119 = arith.constant 0 : index
    %466 = vector.load %arg5[%465, %c0_119] : memref<16x32xf32, #tpu.memory_space<vmem>>, vector<2x16xf32>
    tpu.vector_store %arg5[%465, %c0_119], %444 {strides = array<i32>} : memref<16x32xf32, #tpu.memory_space<vmem>>, vector<2x16xf32>,
    %467 = arith.index_cast %407 : i32 to index
    %c16_120 = arith.constant 16 : index
    %468 = vector.load %arg5[%467, %c16_120] : memref<16x32xf32, #tpu.memory_space<vmem>>, vector<2x16xf32>
    tpu.vector_store %arg5[%467, %c16_120], %464 {strides = array<i32>} : memref<16x32xf32, #tpu.memory_space<vmem>>, vector<2x16xf32>,
    %c7_i32_121 = arith.constant 7 : i32
    %c2_i32_122 = arith.constant 2 : i32
    %469 = arith.muli %c7_i32_121, %c2_i32_122 : i32
    %c7_i32_123 = arith.constant 7 : i32
    %470 = arith.subi %c7_i32_123, %c7_i32_121 : i32
    %c2_i32_124 = arith.constant 2 : i32
    %471 = arith.muli %470, %c2_i32_124 : i32
    %472 = arith.index_cast %469 : i32 to index
    %c0_125 = arith.constant 0 : index
    %473 = vector.load %arg6[%472, %c0_125] : memref<16x96xf32, #tpu.memory_space<vmem>>, vector<2x48xf32>
    %474 = arith.index_cast %471 : i32 to index
    %c48_126 = arith.constant 48 : index
    %475 = vector.load %arg6[%474, %c48_126] : memref<16x96xf32, #tpu.memory_space<vmem>>, vector<2x48xf32>
    %476 = arith.index_cast %c7_i32_121 : i32 to index
    %c0_127 = arith.constant 0 : index
    %477 = vector.load %arg2[%476, %c0_127] : memref<8x96xf32, #tpu.memory_space<vmem>>, vector<1x48xf32>
    %478 = vector.broadcast %477 : vector<1x48xf32> to vector<2x48xf32>
    %479 = arith.addf %473, %478 : vector<2x48xf32>
    %c7_i32_128 = arith.constant 7 : i32
    %480 = arith.subi %c7_i32_128, %c7_i32_121 : i32
    %481 = arith.index_cast %480 : i32 to index
    %c48_129 = arith.constant 48 : index
    %482 = vector.load %arg2[%481, %c48_129] : memref<8x96xf32, #tpu.memory_space<vmem>>, vector<1x48xf32>
    %483 = vector.broadcast %482 : vector<1x48xf32> to vector<2x48xf32>
    %484 = arith.addf %475, %483 : vector<2x48xf32>
    %cst_130 = arith.constant dense<0.000000e+00> : vector<2x48xf32>
    %485 = tpu.matmul %444, %11, %cst_130 {dimension_numbers = #tpu.dot_dimension_numbers<[1], [0], [0], [1], [0, 0, 1, 1], [], []>} : vector<2x16xf32>, vector<16x48xf32>, vector<2x48xf32> -> vector<2x48xf32>
    %486 = arith.addf %485, %16 : vector<2x48xf32>
    %cst_131 = arith.constant dense<0.000000e+00> : vector<2x48xf32>
    %487 = tpu.matmul %464, %12, %cst_131 {dimension_numbers = #tpu.dot_dimension_numbers<[1], [0], [0], [1], [0, 0, 1, 1], [], []>} : vector<2x16xf32>, vector<16x48xf32>, vector<2x48xf32> -> vector<2x48xf32>
    %488 = arith.addf %487, %19 : vector<2x48xf32>
    %489 = vector.extract_strided_slice %479 {offsets = [0, 0], sizes = [2, 32], strides = [1, 1]} : vector<2x48xf32> to vector<2x32xf32>
    %490 = vector.extract_strided_slice %486 {offsets = [0, 0], sizes = [2, 32], strides = [1, 1]} : vector<2x48xf32> to vector<2x32xf32>
    %491 = arith.addf %489, %490 : vector<2x32xf32>
    %492 = arith.negf %491 : vector<2x32xf32>
    %493 = math.exp %492 : vector<2x32xf32>
    %cst_132 = arith.constant 1.000000e+00 : f32
    %494 = vector.broadcast %cst_132 : f32 to vector<2x32xf32>
    %495 = arith.addf %494, %493 : vector<2x32xf32>
    %496 = arith.divf %494, %495 : vector<2x32xf32>
    %497 = vector.extract_strided_slice %496 {offsets = [0, 0], sizes = [2, 16], strides = [1, 1]} : vector<2x32xf32> to vector<2x16xf32>
    %498 = vector.extract_strided_slice %496 {offsets = [0, 16], sizes = [2, 16], strides = [1, 1]} : vector<2x32xf32> to vector<2x16xf32>
    %499 = vector.extract_strided_slice %479 {offsets = [0, 32], sizes = [2, 16], strides = [1, 1]} : vector<2x48xf32> to vector<2x16xf32>
    %500 = vector.extract_strided_slice %486 {offsets = [0, 32], sizes = [2, 16], strides = [1, 1]} : vector<2x48xf32> to vector<2x16xf32>
    %501 = arith.mulf %497, %500 : vector<2x16xf32>
    %502 = arith.addf %499, %501 : vector<2x16xf32>
    %503 = math.tanh %502 : vector<2x16xf32>
    %cst_133 = arith.constant 1.000000e+00 : f32
    %504 = vector.broadcast %cst_133 : f32 to vector<2x16xf32>
    %505 = arith.subf %504, %498 : vector<2x16xf32>
    %506 = arith.mulf %505, %503 : vector<2x16xf32>
    %507 = arith.mulf %498, %444 : vector<2x16xf32>
    %508 = arith.addf %506, %507 : vector<2x16xf32>
    %509 = vector.extract_strided_slice %484 {offsets = [0, 0], sizes = [2, 32], strides = [1, 1]} : vector<2x48xf32> to vector<2x32xf32>
    %510 = vector.extract_strided_slice %488 {offsets = [0, 0], sizes = [2, 32], strides = [1, 1]} : vector<2x48xf32> to vector<2x32xf32>
    %511 = arith.addf %509, %510 : vector<2x32xf32>
    %512 = arith.negf %511 : vector<2x32xf32>
    %513 = math.exp %512 : vector<2x32xf32>
    %cst_134 = arith.constant 1.000000e+00 : f32
    %514 = vector.broadcast %cst_134 : f32 to vector<2x32xf32>
    %515 = arith.addf %514, %513 : vector<2x32xf32>
    %516 = arith.divf %514, %515 : vector<2x32xf32>
    %517 = vector.extract_strided_slice %516 {offsets = [0, 0], sizes = [2, 16], strides = [1, 1]} : vector<2x32xf32> to vector<2x16xf32>
    %518 = vector.extract_strided_slice %516 {offsets = [0, 16], sizes = [2, 16], strides = [1, 1]} : vector<2x32xf32> to vector<2x16xf32>
    %519 = vector.extract_strided_slice %484 {offsets = [0, 32], sizes = [2, 16], strides = [1, 1]} : vector<2x48xf32> to vector<2x16xf32>
    %520 = vector.extract_strided_slice %488 {offsets = [0, 32], sizes = [2, 16], strides = [1, 1]} : vector<2x48xf32> to vector<2x16xf32>
    %521 = arith.mulf %517, %520 : vector<2x16xf32>
    %522 = arith.addf %519, %521 : vector<2x16xf32>
    %523 = math.tanh %522 : vector<2x16xf32>
    %cst_135 = arith.constant 1.000000e+00 : f32
    %524 = vector.broadcast %cst_135 : f32 to vector<2x16xf32>
    %525 = arith.subf %524, %518 : vector<2x16xf32>
    %526 = arith.mulf %525, %523 : vector<2x16xf32>
    %527 = arith.mulf %518, %464 : vector<2x16xf32>
    %528 = arith.addf %526, %527 : vector<2x16xf32>
    %529 = arith.index_cast %469 : i32 to index
    %c0_136 = arith.constant 0 : index
    %530 = vector.load %arg5[%529, %c0_136] : memref<16x32xf32, #tpu.memory_space<vmem>>, vector<2x16xf32>
    tpu.vector_store %arg5[%529, %c0_136], %508 {strides = array<i32>} : memref<16x32xf32, #tpu.memory_space<vmem>>, vector<2x16xf32>,
    %531 = arith.index_cast %471 : i32 to index
    %c16_137 = arith.constant 16 : index
    %532 = vector.load %arg5[%531, %c16_137] : memref<16x32xf32, #tpu.memory_space<vmem>>, vector<2x16xf32>
    tpu.vector_store %arg5[%531, %c16_137], %528 {strides = array<i32>} : memref<16x32xf32, #tpu.memory_space<vmem>>, vector<2x16xf32>,
    %c8_i32 = arith.constant 8 : i32
    return
  }
}

</mosaic_0001>

<llo_original>
// kernel: tpu_custom_call.1
$region0: #{tpu_custom_call.1}
  #allocation0 [shape = 'u32[]', space=smem, size = 0x4, offset = 0x4, fixed_abs, tag = 'smem constant byte address 0x4 - core index']
  #allocation1 [shape = 'u32[72,128]{1,0:T(1,128)}', space=vmem, size = 0x9000, scoped, tag = 'internal scratch']
  #allocation2 [shape = 'f32[16,96]{1,0:T(8,128)}', space=vmem, size = 0x2000, scoped, tag = 'scratch operand']
  %s0 = inlined_call_operand.vmem [shape: s32[16,1], index: 0, kind: input, shape index: {}]
  %s1 = inlined_call_operand.hbm [shape: f32[50,96], index: 1, kind: input, shape index: {}]
  %s2 = inlined_call_operand.hbm [shape: f32[8,96], index: 2, kind: input, shape index: {}]
  %s3 = inlined_call_operand.vmem [shape: f32[16,96], index: 3, kind: input, shape index: {}]
  %s4 = inlined_call_operand.vmem [shape: f32[1,96], index: 4, kind: input, shape index: {}]
  %s5 = inlined_call_operand.hbm [shape: f32[16,32], index: 5, kind: output, shape index: {}]
  %s6 = sld [smem:[#allocation0]]
  $region38: #{tpu_custom_call.1} parent=0
    _
  %s8 = ssub.s32 1, %s6
  %s9 = scalar_select 0, %s8, %s6
  $region1: #{tpu_custom_call.1} parent=0
    #allocation3 [shape = 'u8[28672]{0}', space=vmem, size = 0x7000, scoped, tag = 'input window, operand 1, single buffered']
    #allocation4 [shape = 's32[1]{0}', space=sflag, size = 0x4, scoped, tag = 'scoped memory for tpu_custom_call.1']
    #allocation5 [shape = 's32[1]{0}', space=sflag, size = 0x4, scoped, tag = 'scoped memory for tpu_custom_call.1']
    #allocation6 [shape = 'u8[4096]{0}', space=vmem, size = 0x1000, scoped, tag = 'input window, operand 2, single buffered']
    #allocation7 [shape = 's32[1]{0}', space=sflag, size = 0x4, scoped, tag = 'scoped memory for tpu_custom_call.1']
    #allocation8 [shape = 'u8[8192]{0}', space=vmem, size = 0x2000, scoped, tag = 'output window, operand 0, single buffered']
    %10 = vsyncpa [#allocation4], 0
    %11 = vsyncpa [#allocation7], 0
    %12 = vsyncpa [#allocation5], 0
    // Predicated region
    $region2: #{tpu_custom_call.1} parent=1 // pred_check
      _
    $region3: #{tpu_custom_call.1} parent=1 // pred_check_branch
      %14 = sbr.rel (0) target = $region5
    $region4: #{tpu_custom_call.1} parent=1 // pred_region
      _
    $region5: #{tpu_custom_call.1} parent=1 // pred_fallthru
      _
    // Predicated region
    $region6: #{tpu_custom_call.1} parent=1 // pred_check
      _
    $region7: #{tpu_custom_call.1} parent=1 // pred_check_branch
      %16 = sbr.rel (0) target = $region9
    $region8: #{tpu_custom_call.1} parent=1 // pred_region
      %18 = vsyncadd [#allocation4], 0
      %s19 = sshll.u32 %s1, 4
      %s20 = int_to_ptr.hbm [resolvable:$true] %s19
      %s21 = sshll.u32 [#allocation3], 4
      %s22 = int_to_ptr.vmem [resolvable:$true] %s21
      %27 = dma.hbm_to_vmem [thread:$0]  %s20, 896, %s22, [#allocation4], 128, 128, 8
    $region9: #{tpu_custom_call.1} parent=1 // pred_fallthru
      _
    // Predicated region
    $region10: #{tpu_custom_call.1} parent=1 // pred_check
      _
    $region11: #{tpu_custom_call.1} parent=1 // pred_check_branch
      %29 = sbr.rel (0) target = $region13
    $region12: #{tpu_custom_call.1} parent=1 // pred_region
      %31 = vsyncadd [#allocation7], 0
      %s33 = sshll.u32 %s2, 4
      %s34 = int_to_ptr.hbm [resolvable:$true] %s33
      %s35 = sshll.u32 [#allocation6], 4
      %s36 = int_to_ptr.vmem [resolvable:$true] %s35
      %38 = dma.hbm_to_vmem [thread:$0]  %s34, 128, %s36, [#allocation7]
    $region13: #{tpu_custom_call.1} parent=1 // pred_fallthru
      _
    // Predicated region
    $region14: #{tpu_custom_call.1} parent=1 // pred_check
      _
    $region15: #{tpu_custom_call.1} parent=1 // pred_check_branch
      %40 = sbr.rel (0) target = $region17
    $region16: #{tpu_custom_call.1} parent=1 // pred_region
      _
    $region17: #{tpu_custom_call.1} parent=1 // pred_fallthru
      _
    // Predicated region
    $region18: #{tpu_custom_call.1} parent=1 // pred_check
      _
    $region19: #{tpu_custom_call.1} parent=1 // pred_check_branch
      %42 = sbr.rel (0) target = $region21
    $region20: #{tpu_custom_call.1} parent=1 // pred_region
      _
    $region21: #{tpu_custom_call.1} parent=1 // pred_fallthru
      _
    // Predicated region
    $region22: #{tpu_custom_call.1} parent=1 // pred_check
      _
    $region23: #{tpu_custom_call.1} parent=1 // pred_check_branch
      %44 = sbr.rel (0) target = $region25
    $region24: #{tpu_custom_call.1} parent=1 // pred_region
      %46 = dma.done [#allocation4], 896
    $region25: #{tpu_custom_call.1} parent=1 // pred_fallthru
      _
    // Predicated region
    $region26: #{tpu_custom_call.1} parent=1 // pred_check
      _
    $region27: #{tpu_custom_call.1} parent=1 // pred_check_branch
      %48 = sbr.rel (0) target = $region29
    $region28: #{tpu_custom_call.1} parent=1 // pred_region
      %50 = dma.done [#allocation7], 128
    $region29: #{tpu_custom_call.1} parent=1 // pred_fallthru
      _
    %v51 = vld [vmem:[%s0] sm:$0xff]
    %v52 = vld [vmem:[%s0 + $0x8] sm:$0xff]
    %v53 = vlaneseq
    %v54 = vand.u32 %v53, 127
    %55 = vset.pattern.permute.xlu0 0
    %56 = vperm.xlu0 %55, %v51
    %v57 = vpop.permute.xlu0 %56
    %58 = vset.pattern.permute.xlu0 0
    %59 = vperm.xlu0 %58, %v52
    %v60 = vpop.permute.xlu0 %59
    %vm61 = vcmp.eq.s32.totalorder %v57, %v54
    %vm62 = vcmp.eq.s32.totalorder %v60, %v54
    %v63 = vsel %vm61, 1.0, 0.0
    %v64 = vsel %vm62, 1.0, 0.0
    %v65 = vld [vmem:[#allocation3] sm:$0xff]
    %v66 = vld [vmem:[#allocation3 + $0x8] sm:$0xff]
    %v67 = vld [vmem:[#allocation3 + $0x10] sm:$0xff]
    %v68 = vld [vmem:[#allocation3 + $0x18] sm:$0xff]
    %v69 = vld [vmem:[#allocation3 + $0x20] sm:$0xff]
    %v70 = vld [vmem:[#allocation3 + $0x28] sm:$0xff]
    %v71 = vld [vmem:[#allocation3 + $0x30] sm:$0x3]
    %vm72 = vcmask 408576
    %v74 = vsel %vm72, %v63, 0
    %v77 = vsel %vm72, %v64, 0
    %vm79 = vcmask 1041408
    %v81 = vsel %vm79, %v71, 0
    %83 = vmatpush.msra.mxu0 0.0
    %84 = vmatpush.msra.mxu0 0.0
    %85 = vmatpush.msra.mxu0 0.0
    %86 = vmatpush.msra.mxu0 0.0
    %87 = vmatpush.msra.mxu0 0.0
    %88 = vmatpush.msra.mxu0 0.0
    %89 = vmatpush.msra.mxu0 0.0
    %90 = vmatpush.msra.mxu0 0.0
    %91 = vmatpush.msra.mxu0 0.0
    %92 = vmatpush.msra.mxu0 %v81
    %93 = vmatpush.msra.mxu0 %v70
    %94 = vmatpush.msra.mxu0 %v69
    %95 = vmatpush.msra.mxu0 %v68
    %96 = vmatpush.msra.mxu0 %v67
    %97 = vmatpush.msra.mxu0 %v66
    %98 = vmatpush.msra.mxu0 %v65
    %99 = vmatmul.f32.gmra.mxu0 %v74
    %v100 = vpop.f32.mrf.mxu0
    %v101 = vadd.f32 0.0, %v100
    %102 = vmatmul.f32.gmra.mxu0 %v77
    %v103 = vpop.f32.mrf.mxu0
    %v104 = vadd.f32 0.0, %v103
    %105 = vdwg.mxu0
    %vm106 = vcmask 785408
    %107 = vst.msk [vmem:[#allocation2] sm:$0xff] %vm106, %v101
    %108 = vst.msk [vmem:[#allocation2 + $0x8] sm:$0xff] %vm106, %v104
    %v109 = vld [vmem:[%s3] sm:$0xff]
    %v110 = vld [vmem:[%s3 + $0x8] sm:$0xff]
    %v111 = vld [vmem:[%s4] sm:$0x1]
    %v113 = vperm.slane %v111, 0
    %v115 = vld [vmem:[#allocation2] sm:$0x3]
    %v116 = vld [vmem:[#allocation2 + $0xe] sm:$0x3]
    %v117 = vld [vmem:[#allocation6] sm:$0x1]
    %v118 = vperm.slane %v117, 0
    %v119 = vadd.f32 %v115, %v118
    %v120 = vld [vmem:[#allocation6 + $0x7] sm:$0x1]
    %v121 = vperm.slane %v120, 0
    %v122 = vadd.f32 %v116, %v121
    %vm123 = vcmask 130048
    %v125 = vsel %vm123, 0.0, 0
    %127 = vmatpush.msra.mxu0 0.0
    %128 = vmatpush.msra.mxu0 0.0
    %129 = vmatpush.msra.mxu0 0.0
    %130 = vmatpush.msra.mxu0 0.0
    %131 = vmatpush.msra.mxu0 0.0
    %132 = vmatpush.msra.mxu0 0.0
    %133 = vmatpush.msra.mxu0 0.0
    %134 = vmatpush.msra.mxu0 0.0
    %135 = vmatpush.msra.mxu0 0.0
    %136 = vmatpush.msra.mxu0 0.0
    %137 = vmatpush.msra.mxu0 0.0
    %138 = vmatpush.msra.mxu0 0.0
    %139 = vmatpush.msra.mxu0 0.0
    %140 = vmatpush.msra.mxu0 0.0
    %141 = vmatpush.msra.mxu0 %v110
    %142 = vmatpush.msra.mxu0 %v109
    %143 = vmatmul.f32.gmra.mxu0 %v125
    %v144 = vpop.f32.mrf.mxu0
    %v145 = vadd.f32 %v113, %v144
    %146 = vdwg.mxu0
    %149 = vrot.lane.b32.xlu0 %v109, 80
    %v150 = vpop.permute.xlu0 %149
    %151 = vrot.lane.b32.xlu0 %v110, 80
    %v152 = vpop.permute.xlu0 %151
    %155 = vrot.lane.b32.xlu0 %v113, 80
    %v156 = vpop.permute.xlu0 %155
    %158 = vmatpush.msra.mxu0 0.0
    %159 = vmatpush.msra.mxu0 0.0
    %160 = vmatpush.msra.mxu0 0.0
    %161 = vmatpush.msra.mxu0 0.0
    %162 = vmatpush.msra.mxu0 0.0
    %163 = vmatpush.msra.mxu0 0.0
    %164 = vmatpush.msra.mxu0 0.0
    %165 = vmatpush.msra.mxu0 0.0
    %166 = vmatpush.msra.mxu0 0.0
    %167 = vmatpush.msra.mxu0 0.0
    %168 = vmatpush.msra.mxu0 0.0
    %169 = vmatpush.msra.mxu0 0.0
    %170 = vmatpush.msra.mxu0 0.0
    %171 = vmatpush.msra.mxu0 0.0
    %172 = vmatpush.msra.mxu0 %v152
    %173 = vmatpush.msra.mxu0 %v150
    %174 = vmatmul.f32.gmra.mxu0 %v125
    %v175 = vpop.f32.mrf.mxu0
    %v176 = vadd.f32 %v156, %v175
    %177 = vdwg.mxu0
    %v178 = vadd.f32 %v119, %v145
    %v179 = vxor.u32 %v178, 2147483648
    %v180 = vmul.f32 %v179, 1.442695
    %v181 = vpow.pop %v180
    %v182 = vadd.f32 %v181, 1.0
    %v183 = vrcp.pop %v182
    %v184 = vmul.f32 %v182, %v183
    %v185 = vsub.f32 1.0, %v184
    %v186 = vmul.f32 %v183, %v185
    %v187 = vadd.f32 %v183, %v186
    %vm188 = vweird.f32 %v182
    %vm189 = vweird.f32 %v183
    %vm190 = vmor %vm188, %vm189
    %v191 = vsel %vm190, %v183, %v187
    %v192 = vand.u32 2147483647, %v182
    %vm193 = vcmp.eq.f32.partialorder %v192, 8.507059e+37
    %v194 = vand.u32 %v182, 2147483648
    %v195 = vor.u32 1.1754944e-38, %v194
    %v196 = vsel %vm193, %v195, %v191
    %v197 = vmul.f32 1.0, %v196
    %199 = vrot.lane.b32.xlu0 %v145, 96
    %v200 = vpop.permute.xlu0 %199
    %v202 = vmul.f32 %v197, %v200
    %204 = vrot.lane.b32.xlu0 %v202, 32
    %v205 = vpop.permute.xlu0 %204
    %v207 = vadd.f32 %v119, %v205
    %v208 = vtanh.pop %v207
    %v209 = vsub.f32 1.0, %v197
    %211 = vrot.lane.b32.xlu0 %v208, 112
    %v212 = vpop.permute.xlu0 %211
    %v214 = vmul.f32 %v209, %v212
    %v215 = vmul.f32 %v197, 0.0
    %v216 = vadd.f32 %v214, %v215
    %218 = vrot.lane.b32.xlu0 %v176, 48
    %v219 = vpop.permute.xlu0 %218
    %v221 = vadd.f32 %v122, %v219
    %v222 = vxor.u32 %v221, 2147483648
    %v223 = vmul.f32 %v222, 1.442695
    %v224 = vpow.pop %v223
    %v225 = vadd.f32 %v224, 1.0
    %v226 = vrcp.pop %v225
    %v227 = vmul.f32 %v225, %v226
    %v228 = vsub.f32 1.0, %v227
    %v229 = vmul.f32 %v226, %v228
    %v230 = vadd.f32 %v226, %v229
    %vm231 = vweird.f32 %v225
    %vm232 = vweird.f32 %v226
    %vm233 = vmor %vm231, %vm232
    %v234 = vsel %vm233, %v226, %v230
    %v235 = vand.u32 2147483647, %v225
    %vm236 = vcmp.eq.f32.partialorder %v235, 8.507059e+37
    %v237 = vand.u32 %v225, 2147483648
    %v238 = vor.u32 1.1754944e-38, %v237
    %v239 = vsel %vm236, %v238, %v234
    %v240 = vmul.f32 1.0, %v239
    %241 = vrot.lane.b32.xlu0 %v176, 16
    %v242 = vpop.permute.xlu0 %241
    %v244 = vmul.f32 %v240, %v242
    %246 = vrot.lane.b32.xlu0 %v244, 32
    %v247 = vpop.permute.xlu0 %246
    %v249 = vadd.f32 %v122, %v247
    %v250 = vtanh.pop %v249
    %v251 = vsub.f32 1.0, %v240
    %253 = vrot.lane.b32.xlu0 %v250, 112
    %v254 = vpop.permute.xlu0 %253
    %v256 = vmul.f32 %v251, %v254
    %v257 = vmul.f32 %v240, 0.0
    %v258 = vadd.f32 %v256, %v257
    %260 = vrot.lane.b32.xlu0 %v216, 112
    %v261 = vpop.permute.xlu0 %260
    %vm263 = vcmask 123904
    %264 = vst.msk [vmem:[#allocation8] sm:$0x3] %vm263, %v261
    %266 = vrot.lane.b32.xlu0 %v258, 80
    %v267 = vpop.permute.xlu0 %266
    %vm269 = vcmask 255104
    %270 = vst.msk [vmem:[#allocation8 + $0xe] sm:$0x3] %vm269, %v267
    %v271 = vld [vmem:[#allocation2 + $0x2] sm:$0x3]
    %v272 = vld [vmem:[#allocation2 + $0xc] sm:$0x3]
    %v273 = vld [vmem:[#allocation6 + $0x1] sm:$0x1]
    %v274 = vperm.slane %v273, 0
    %v275 = vadd.f32 %v271, %v274
    %v276 = vld [vmem:[#allocation6 + $0x6] sm:$0x1]
    %v277 = vperm.slane %v276, 0
    %v278 = vadd.f32 %v272, %v277
    %v279 = vsel %vm123, %v261, 0
    %281 = vmatpush.msra.mxu0 0.0
    %282 = vmatpush.msra.mxu0 0.0
    %283 = vmatpush.msra.mxu0 0.0
    %284 = vmatpush.msra.mxu0 0.0
    %285 = vmatpush.msra.mxu0 0.0
    %286 = vmatpush.msra.mxu0 0.0
    %287 = vmatpush.msra.mxu0 0.0
    %288 = vmatpush.msra.mxu0 0.0
    %289 = vmatpush.msra.mxu0 0.0
    %290 = vmatpush.msra.mxu0 0.0
    %291 = vmatpush.msra.mxu0 0.0
    %292 = vmatpush.msra.mxu0 0.0
    %293 = vmatpush.msra.mxu0 0.0
    %294 = vmatpush.msra.mxu0 0.0
    %295 = vmatpush.msra.mxu0 %v110
    %296 = vmatpush.msra.mxu0 %v109
    %297 = vmatmul.f32.gmra.mxu0 %v279
    %v298 = vpop.f32.mrf.mxu0
    %v299 = vadd.f32 %v113, %v298
    %300 = vdwg.mxu0
    %301 = vrot.lane.b32.xlu0 %v258, 64
    %v302 = vpop.permute.xlu0 %301
    %v303 = vsel %vm123, %v302, 0
    %305 = vmatpush.msra.mxu0 0.0
    %306 = vmatpush.msra.mxu0 0.0
    %307 = vmatpush.msra.mxu0 0.0
    %308 = vmatpush.msra.mxu0 0.0
    %309 = vmatpush.msra.mxu0 0.0
    %310 = vmatpush.msra.mxu0 0.0
    %311 = vmatpush.msra.mxu0 0.0
    %312 = vmatpush.msra.mxu0 0.0
    %313 = vmatpush.msra.mxu0 0.0
    %314 = vmatpush.msra.mxu0 0.0
    %315 = vmatpush.msra.mxu0 0.0
    %316 = vmatpush.msra.mxu0 0.0
    %317 = vmatpush.msra.mxu0 0.0
    %318 = vmatpush.msra.mxu0 0.0
    %319 = vmatpush.msra.mxu0 %v152
    %320 = vmatpush.msra.mxu0 %v150
    %321 = vmatmul.f32.gmra.mxu0 %v303
    %v322 = vpop.f32.mrf.mxu0
    %v323 = vadd.f32 %v156, %v322
    %324 = vdwg.mxu0
    %v325 = vadd.f32 %v275, %v299
    %v326 = vxor.u32 %v325, 2147483648
    %v327 = vmul.f32 %v326, 1.442695
    %v328 = vpow.pop %v327
    %v329 = vadd.f32 %v328, 1.0
    %v330 = vrcp.pop %v329
    %v331 = vmul.f32 %v329, %v330
    %v332 = vsub.f32 1.0, %v331
    %v333 = vmul.f32 %v330, %v332
    %v334 = vadd.f32 %v330, %v333
    %vm335 = vweird.f32 %v329
    %vm336 = vweird.f32 %v330
    %vm337 = vmor %vm335, %vm336
    %v338 = vsel %vm337, %v330, %v334
    %v339 = vand.u32 2147483647, %v329
    %vm340 = vcmp.eq.f32.partialorder %v339, 8.507059e+37
    %v341 = vand.u32 %v329, 2147483648
    %v342 = vor.u32 1.1754944e-38, %v341
    %v343 = vsel %vm340, %v342, %v338
    %v344 = vmul.f32 1.0, %v343
    %346 = vrot.lane.b32.xlu0 %v299, 96
    %v347 = vpop.permute.xlu0 %346
    %v349 = vmul.f32 %v344, %v347
    %351 = vrot.lane.b32.xlu0 %v349, 32
    %v352 = vpop.permute.xlu0 %351
    %v354 = vadd.f32 %v275, %v352
    %v355 = vtanh.pop %v354
    %v356 = vsub.f32 1.0, %v344
    %358 = vrot.lane.b32.xlu0 %v355, 112
    %v359 = vpop.permute.xlu0 %358
    %v361 = vmul.f32 %v356, %v359
    %v362 = vmul.f32 %v344, %v216
    %v363 = vadd.f32 %v361, %v362
    %365 = vrot.lane.b32.xlu0 %v323, 48
    %v366 = vpop.permute.xlu0 %365
    %v368 = vadd.f32 %v278, %v366
    %v369 = vxor.u32 %v368, 2147483648
    %v370 = vmul.f32 %v369, 1.442695
    %v371 = vpow.pop %v370
    %v372 = vadd.f32 %v371, 1.0
    %v373 = vrcp.pop %v372
    %v374 = vmul.f32 %v372, %v373
    %v375 = vsub.f32 1.0, %v374
    %v376 = vmul.f32 %v373, %v375
    %v377 = vadd.f32 %v373, %v376
    %vm378 = vweird.f32 %v372
    %vm379 = vweird.f32 %v373
    %vm380 = vmor %vm378, %vm379
    %v381 = vsel %vm380, %v373, %v377
    %v382 = vand.u32 2147483647, %v372
    %vm383 = vcmp.eq.f32.partialorder %v382, 8.507059e+37
    %v384 = vand.u32 %v372, 2147483648
    %v385 = vor.u32 1.1754944e-38, %v384
    %v386 = vsel %vm383, %v385, %v381
    %v387 = vmul.f32 1.0, %v386
    %388 = vrot.lane.b32.xlu0 %v323, 16
    %v389 = vpop.permute.xlu0 %388
    %v391 = vmul.f32 %v387, %v389
    %393 = vrot.lane.b32.xlu0 %v391, 32
    %v394 = vpop.permute.xlu0 %393
    %v396 = vadd.f32 %v278, %v394
    %v397 = vtanh.pop %v396
    %v398 = vsub.f32 1.0, %v387
    %400 = vrot.lane.b32.xlu0 %v397, 112
    %v401 = vpop.permute.xlu0 %400
    %v403 = vmul.f32 %v398, %v401
    %v404 = vmul.f32 %v387, %v258
    %v405 = vadd.f32 %v403, %v404
    %407 = vrot.lane.b32.xlu0 %v363, 112
    %v408 = vpop.permute.xlu0 %407
    %410 = vst.msk [vmem:[#allocation8 + $0x2] sm:$0x3] %vm263, %v408
    %412 = vrot.lane.b32.xlu0 %v405, 80
    %v413 = vpop.permute.xlu0 %412
    %415 = vst.msk [vmem:[#allocation8 + $0xc] sm:$0x3] %vm269, %v413
    %v416 = vld [vmem:[#allocation2 + $0x4] sm:$0x3]
    %v417 = vld [vmem:[#allocation2 + $0xa] sm:$0x3]
    %v418 = vld [vmem:[#allocation6 + $0x2] sm:$0x1]
    %v419 = vperm.slane %v418, 0
    %v420 = vadd.f32 %v416, %v419
    %v421 = vld [vmem:[#allocation6 + $0x5] sm:$0x1]
    %v422 = vperm.slane %v421, 0
    %v423 = vadd.f32 %v417, %v422
    %v424 = vsel %vm123, %v408, 0
    %426 = vmatpush.msra.mxu0 0.0
    %427 = vmatpush.msra.mxu0 0.0
    %428 = vmatpush.msra.mxu0 0.0
    %429 = vmatpush.msra.mxu0 0.0
    %430 = vmatpush.msra.mxu0 0.0
    %431 = vmatpush.msra.mxu0 0.0
    %432 = vmatpush.msra.mxu0 0.0
    %433 = vmatpush.msra.mxu0 0.0
    %434 = vmatpush.msra.mxu0 0.0
    %435 = vmatpush.msra.mxu0 0.0
    %436 = vmatpush.msra.mxu0 0.0
    %437 = vmatpush.msra.mxu0 0.0
    %438 = vmatpush.msra.mxu0 0.0
    %439 = vmatpush.msra.mxu0 0.0
    %440 = vmatpush.msra.mxu0 %v110
    %441 = vmatpush.msra.mxu0 %v109
    %442 = vmatmul.f32.gmra.mxu0 %v424
    %v443 = vpop.f32.mrf.mxu0
    %v444 = vadd.f32 %v113, %v443
    %445 = vdwg.mxu0
    %446 = vrot.lane.b32.xlu0 %v405, 64
    %v447 = vpop.permute.xlu0 %446
    %v448 = vsel %vm123, %v447, 0
    %450 = vmatpush.msra.mxu0 0.0
    %451 = vmatpush.msra.mxu0 0.0
    %452 = vmatpush.msra.mxu0 0.0
    %453 = vmatpush.msra.mxu0 0.0
    %454 = vmatpush.msra.mxu0 0.0
    %455 = vmatpush.msra.mxu0 0.0
    %456 = vmatpush.msra.mxu0 0.0
    %457 = vmatpush.msra.mxu0 0.0
    %458 = vmatpush.msra.mxu0 0.0
    %459 = vmatpush.msra.mxu0 0.0
    %460 = vmatpush.msra.mxu0 0.0
    %461 = vmatpush.msra.mxu0 0.0
    %462 = vmatpush.msra.mxu0 0.0
    %463 = vmatpush.msra.mxu0 0.0
    %464 = vmatpush.msra.mxu0 %v152
    %465 = vmatpush.msra.mxu0 %v150
    %466 = vmatmul.f32.gmra.mxu0 %v448
    %v467 = vpop.f32.mrf.mxu0
    %v468 = vadd.f32 %v156, %v467
    %469 = vdwg.mxu0
    %v470 = vadd.f32 %v420, %v444
    %v471 = vxor.u32 %v470, 2147483648
    %v472 = vmul.f32 %v471, 1.442695
    %v473 = vpow.pop %v472
    %v474 = vadd.f32 %v473, 1.0
    %v475 = vrcp.pop %v474
    %v476 = vmul.f32 %v474, %v475
    %v477 = vsub.f32 1.0, %v476
    %v478 = vmul.f32 %v475, %v477
    %v479 = vadd.f32 %v475, %v478
    %vm480 = vweird.f32 %v474
    %vm481 = vweird.f32 %v475
    %vm482 = vmor %vm480, %vm481
    %v483 = vsel %vm482, %v475, %v479
    %v484 = vand.u32 2147483647, %v474
    %vm485 = vcmp.eq.f32.partialorder %v484, 8.507059e+37
    %v486 = vand.u32 %v474, 2147483648
    %v487 = vor.u32 1.1754944e-38, %v486
    %v488 = vsel %vm485, %v487, %v483
    %v489 = vmul.f32 1.0, %v488
    %491 = vrot.lane.b32.xlu0 %v444, 96
    %v492 = vpop.permute.xlu0 %491
    %v494 = vmul.f32 %v489, %v492
    %496 = vrot.lane.b32.xlu0 %v494, 32
    %v497 = vpop.permute.xlu0 %496
    %v499 = vadd.f32 %v420, %v497
    %v500 = vtanh.pop %v499
    %v501 = vsub.f32 1.0, %v489
    %503 = vrot.lane.b32.xlu0 %v500, 112
    %v504 = vpop.permute.xlu0 %503
    %v506 = vmul.f32 %v501, %v504
    %v507 = vmul.f32 %v489, %v363
    %v508 = vadd.f32 %v506, %v507
    %510 = vrot.lane.b32.xlu0 %v468, 48
    %v511 = vpop.permute.xlu0 %510
    %v513 = vadd.f32 %v423, %v511
    %v514 = vxor.u32 %v513, 2147483648
    %v515 = vmul.f32 %v514, 1.442695
    %v516 = vpow.pop %v515
    %v517 = vadd.f32 %v516, 1.0
    %v518 = vrcp.pop %v517
    %v519 = vmul.f32 %v517, %v518
    %v520 = vsub.f32 1.0, %v519
    %v521 = vmul.f32 %v518, %v520
    %v522 = vadd.f32 %v518, %v521
    %vm523 = vweird.f32 %v517
    %vm524 = vweird.f32 %v518
    %vm525 = vmor %vm523, %vm524
    %v526 = vsel %vm525, %v518, %v522
    %v527 = vand.u32 2147483647, %v517
    %vm528 = vcmp.eq.f32.partialorder %v527, 8.507059e+37
    %v529 = vand.u32 %v517, 2147483648
    %v530 = vor.u32 1.1754944e-38, %v529
    %v531 = vsel %vm528, %v530, %v526
    %v532 = vmul.f32 1.0, %v531
    %533 = vrot.lane.b32.xlu0 %v468, 16
    %v534 = vpop.permute.xlu0 %533
    %v536 = vmul.f32 %v532, %v534
    %538 = vrot.lane.b32.xlu0 %v536, 32
    %v539 = vpop.permute.xlu0 %538
    %v541 = vadd.f32 %v423, %v539
    %v542 = vtanh.pop %v541
    %v543 = vsub.f32 1.0, %v532
    %545 = vrot.lane.b32.xlu0 %v542, 112
    %v546 = vpop.permute.xlu0 %545
    %v548 = vmul.f32 %v543, %v546
    %v549 = vmul.f32 %v532, %v405
    %v550 = vadd.f32 %v548, %v549
    %552 = vrot.lane.b32.xlu0 %v508, 112
    %v553 = vpop.permute.xlu0 %552
    %555 = vst.msk [vmem:[#allocation8 + $0x4] sm:$0x3] %vm263, %v553
    %557 = vrot.lane.b32.xlu0 %v550, 80
    %v558 = vpop.permute.xlu0 %557
    %560 = vst.msk [vmem:[#allocation8 + $0xa] sm:$0x3] %vm269, %v558
    %v561 = vld [vmem:[#allocation2 + $0x6] sm:$0x3]
    %v562 = vld [vmem:[#allocation2 + $0x8] sm:$0x3]
    %v563 = vld [vmem:[#allocation6 + $0x3] sm:$0x1]
    %v564 = vperm.slane %v563, 0
    %v565 = vadd.f32 %v561, %v564
    %v566 = vld [vmem:[#allocation6 + $0x4] sm:$0x1]
    %v567 = vperm.slane %v566, 0
    %v568 = vadd.f32 %v562, %v567
    %v569 = vsel %vm123, %v553, 0
    %571 = vmatpush.msra.mxu0 0.0
    %572 = vmatpush.msra.mxu0 0.0
    %573 = vmatpush.msra.mxu0 0.0
    %574 = vmatpush.msra.mxu0 0.0
    %575 = vmatpush.msra.mxu0 0.0
    %576 = vmatpush.msra.mxu0 0.0
    %577 = vmatpush.msra.mxu0 0.0
    %578 = vmatpush.msra.mxu0 0.0
    %579 = vmatpush.msra.mxu0 0.0
    %580 = vmatpush.msra.mxu0 0.0
    %581 = vmatpush.msra.mxu0 0.0
    %582 = vmatpush.msra.mxu0 0.0
    %583 = vmatpush.msra.mxu0 0.0
    %584 = vmatpush.msra.mxu0 0.0
    %585 = vmatpush.msra.mxu0 %v110
    %586 = vmatpush.msra.mxu0 %v109
    %587 = vmatmul.f32.gmra.mxu0 %v569
    %v588 = vpop.f32.mrf.mxu0
    %v589 = vadd.f32 %v113, %v588
    %590 = vdwg.mxu0
    %591 = vrot.lane.b32.xlu0 %v550, 64
    %v592 = vpop.permute.xlu0 %591
    %v593 = vsel %vm123, %v592, 0
    %595 = vmatpush.msra.mxu0 0.0
    %596 = vmatpush.msra.mxu0 0.0
    %597 = vmatpush.msra.mxu0 0.0
    %598 = vmatpush.msra.mxu0 0.0
    %599 = vmatpush.msra.mxu0 0.0
    %600 = vmatpush.msra.mxu0 0.0
    %601 = vmatpush.msra.mxu0 0.0
    %602 = vmatpush.msra.mxu0 0.0
    %603 = vmatpush.msra.mxu0 0.0
    %604 = vmatpush.msra.mxu0 0.0
    %605 = vmatpush.msra.mxu0 0.0
    %606 = vmatpush.msra.mxu0 0.0
    %607 = vmatpush.msra.mxu0 0.0
    %608 = vmatpush.msra.mxu0 0.0
    %609 = vmatpush.msra.mxu0 %v152
    %610 = vmatpush.msra.mxu0 %v150
    %611 = vmatmul.f32.gmra.mxu0 %v593
    %v612 = vpop.f32.mrf.mxu0
    %v613 = vadd.f32 %v156, %v612
    %614 = vdwg.mxu0
    %v615 = vadd.f32 %v565, %v589
    %v616 = vxor.u32 %v615, 2147483648
    %v617 = vmul.f32 %v616, 1.442695
    %v618 = vpow.pop %v617
    %v619 = vadd.f32 %v618, 1.0
    %v620 = vrcp.pop %v619
    %v621 = vmul.f32 %v619, %v620
    %v622 = vsub.f32 1.0, %v621
    %v623 = vmul.f32 %v620, %v622
    %v624 = vadd.f32 %v620, %v623
    %vm625 = vweird.f32 %v619
    %vm626 = vweird.f32 %v620
    %vm627 = vmor %vm625, %vm626
    %v628 = vsel %vm627, %v620, %v624
    %v629 = vand.u32 2147483647, %v619
    %vm630 = vcmp.eq.f32.partialorder %v629, 8.507059e+37
    %v631 = vand.u32 %v619, 2147483648
    %v632 = vor.u32 1.1754944e-38, %v631
    %v633 = vsel %vm630, %v632, %v628
    %v634 = vmul.f32 1.0, %v633
    %636 = vrot.lane.b32.xlu0 %v589, 96
    %v637 = vpop.permute.xlu0 %636
    %v639 = vmul.f32 %v634, %v637
    %641 = vrot.lane.b32.xlu0 %v639, 32
    %v642 = vpop.permute.xlu0 %641
    %v644 = vadd.f32 %v565, %v642
    %v645 = vtanh.pop %v644
    %v646 = vsub.f32 1.0, %v634
    %648 = vrot.lane.b32.xlu0 %v645, 112
    %v649 = vpop.permute.xlu0 %648
    %v651 = vmul.f32 %v646, %v649
    %v652 = vmul.f32 %v634, %v508
    %v653 = vadd.f32 %v651, %v652
    %655 = vrot.lane.b32.xlu0 %v613, 48
    %v656 = vpop.permute.xlu0 %655
    %v658 = vadd.f32 %v568, %v656
    %v659 = vxor.u32 %v658, 2147483648
    %v660 = vmul.f32 %v659, 1.442695
    %v661 = vpow.pop %v660
    %v662 = vadd.f32 %v661, 1.0
    %v663 = vrcp.pop %v662
    %v664 = vmul.f32 %v662, %v663
    %v665 = vsub.f32 1.0, %v664
    %v666 = vmul.f32 %v663, %v665
    %v667 = vadd.f32 %v663, %v666
    %vm668 = vweird.f32 %v662
    %vm669 = vweird.f32 %v663
    %vm670 = vmor %vm668, %vm669
    %v671 = vsel %vm670, %v663, %v667
    %v672 = vand.u32 2147483647, %v662
    %vm673 = vcmp.eq.f32.partialorder %v672, 8.507059e+37
    %v674 = vand.u32 %v662, 2147483648
    %v675 = vor.u32 1.1754944e-38, %v674
    %v676 = vsel %vm673, %v675, %v671
    %v677 = vmul.f32 1.0, %v676
    %678 = vrot.lane.b32.xlu0 %v613, 16
    %v679 = vpop.permute.xlu0 %678
    %v681 = vmul.f32 %v677, %v679
    %683 = vrot.lane.b32.xlu0 %v681, 32
    %v684 = vpop.permute.xlu0 %683
    %v686 = vadd.f32 %v568, %v684
    %v687 = vtanh.pop %v686
    %v688 = vsub.f32 1.0, %v677
    %690 = vrot.lane.b32.xlu0 %v687, 112
    %v691 = vpop.permute.xlu0 %690
    %v693 = vmul.f32 %v688, %v691
    %v694 = vmul.f32 %v677, %v550
    %v695 = vadd.f32 %v693, %v694
    %697 = vrot.lane.b32.xlu0 %v653, 112
    %v698 = vpop.permute.xlu0 %697
    %700 = vst.msk [vmem:[#allocation8 + $0x6] sm:$0x3] %vm263, %v698
    %702 = vrot.lane.b32.xlu0 %v695, 80
    %v703 = vpop.permute.xlu0 %702
    %705 = vst.msk [vmem:[#allocation8 + $0x8] sm:$0x3] %vm269, %v703
    %v706 = vld [vmem:[#allocation2 + $0x8] sm:$0x3]
    %v707 = vld [vmem:[#allocation2 + $0x6] sm:$0x3]
    %v708 = vld [vmem:[#allocation6 + $0x4] sm:$0x1]
    %v709 = vperm.slane %v708, 0
    %v710 = vadd.f32 %v706, %v709
    %v711 = vld [vmem:[#allocation6 + $0x3] sm:$0x1]
    %v712 = vperm.slane %v711, 0
    %v713 = vadd.f32 %v707, %v712
    %v714 = vsel %vm123, %v698, 0
    %716 = vmatpush.msra.mxu0 0.0
    %717 = vmatpush.msra.mxu0 0.0
    %718 = vmatpush.msra.mxu0 0.0
    %719 = vmatpush.msra.mxu0 0.0
    %720 = vmatpush.msra.mxu0 0.0
    %721 = vmatpush.msra.mxu0 0.0
    %722 = vmatpush.msra.mxu0 0.0
    %723 = vmatpush.msra.mxu0 0.0
    %724 = vmatpush.msra.mxu0 0.0
    %725 = vmatpush.msra.mxu0 0.0
    %726 = vmatpush.msra.mxu0 0.0
    %727 = vmatpush.msra.mxu0 0.0
    %728 = vmatpush.msra.mxu0 0.0
    %729 = vmatpush.msra.mxu0 0.0
    %730 = vmatpush.msra.mxu0 %v110
    %731 = vmatpush.msra.mxu0 %v109
    %732 = vmatmul.f32.gmra.mxu0 %v714
    %v733 = vpop.f32.mrf.mxu0
    %v734 = vadd.f32 %v113, %v733
    %735 = vdwg.mxu0
    %736 = vrot.lane.b32.xlu0 %v695, 64
    %v737 = vpop.permute.xlu0 %736
    %v738 = vsel %vm123, %v737, 0
    %740 = vmatpush.msra.mxu0 0.0
    %741 = vmatpush.msra.mxu0 0.0
    %742 = vmatpush.msra.mxu0 0.0
    %743 = vmatpush.msra.mxu0 0.0
    %744 = vmatpush.msra.mxu0 0.0
    %745 = vmatpush.msra.mxu0 0.0
    %746 = vmatpush.msra.mxu0 0.0
    %747 = vmatpush.msra.mxu0 0.0
    %748 = vmatpush.msra.mxu0 0.0
    %749 = vmatpush.msra.mxu0 0.0
    %750 = vmatpush.msra.mxu0 0.0
    %751 = vmatpush.msra.mxu0 0.0
    %752 = vmatpush.msra.mxu0 0.0
    %753 = vmatpush.msra.mxu0 0.0
    %754 = vmatpush.msra.mxu0 %v152
    %755 = vmatpush.msra.mxu0 %v150
    %756 = vmatmul.f32.gmra.mxu0 %v738
    %v757 = vpop.f32.mrf.mxu0
    %v758 = vadd.f32 %v156, %v757
    %759 = vdwg.mxu0
    %v760 = vadd.f32 %v710, %v734
    %v761 = vxor.u32 %v760, 2147483648
    %v762 = vmul.f32 %v761, 1.442695
    %v763 = vpow.pop %v762
    %v764 = vadd.f32 %v763, 1.0
    %v765 = vrcp.pop %v764
    %v766 = vmul.f32 %v764, %v765
    %v767 = vsub.f32 1.0, %v766
    %v768 = vmul.f32 %v765, %v767
    %v769 = vadd.f32 %v765, %v768
    %vm770 = vweird.f32 %v764
    %vm771 = vweird.f32 %v765
    %vm772 = vmor %vm770, %vm771
    %v773 = vsel %vm772, %v765, %v769
    %v774 = vand.u32 2147483647, %v764
    %vm775 = vcmp.eq.f32.partialorder %v774, 8.507059e+37
    %v776 = vand.u32 %v764, 2147483648
    %v777 = vor.u32 1.1754944e-38, %v776
    %v778 = vsel %vm775, %v777, %v773
    %v779 = vmul.f32 1.0, %v778
    %781 = vrot.lane.b32.xlu0 %v734, 96
    %v782 = vpop.permute.xlu0 %781
    %v784 = vmul.f32 %v779, %v782
    %786 = vrot.lane.b32.xlu0 %v784, 32
    %v787 = vpop.permute.xlu0 %786
    %v789 = vadd.f32 %v710, %v787
    %v790 = vtanh.pop %v789
    %v791 = vsub.f32 1.0, %v779
    %793 = vrot.lane.b32.xlu0 %v790, 112
    %v794 = vpop.permute.xlu0 %793
    %v796 = vmul.f32 %v791, %v794
    %v797 = vmul.f32 %v779, %v653
    %v798 = vadd.f32 %v796, %v797
    %800 = vrot.lane.b32.xlu0 %v758, 48
    %v801 = vpop.permute.xlu0 %800
    %v803 = vadd.f32 %v713, %v801
    %v804 = vxor.u32 %v803, 2147483648
    %v805 = vmul.f32 %v804, 1.442695
    %v806 = vpow.pop %v805
    %v807 = vadd.f32 %v806, 1.0
    %v808 = vrcp.pop %v807
    %v809 = vmul.f32 %v807, %v808
    %v810 = vsub.f32 1.0, %v809
    %v811 = vmul.f32 %v808, %v810
    %v812 = vadd.f32 %v808, %v811
    %vm813 = vweird.f32 %v807
    %vm814 = vweird.f32 %v808
    %vm815 = vmor %vm813, %vm814
    %v816 = vsel %vm815, %v808, %v812
    %v817 = vand.u32 2147483647, %v807
    %vm818 = vcmp.eq.f32.partialorder %v817, 8.507059e+37
    %v819 = vand.u32 %v807, 2147483648
    %v820 = vor.u32 1.1754944e-38, %v819
    %v821 = vsel %vm818, %v820, %v816
    %v822 = vmul.f32 1.0, %v821
    %823 = vrot.lane.b32.xlu0 %v758, 16
    %v824 = vpop.permute.xlu0 %823
    %v826 = vmul.f32 %v822, %v824
    %828 = vrot.lane.b32.xlu0 %v826, 32
    %v829 = vpop.permute.xlu0 %828
    %v831 = vadd.f32 %v713, %v829
    %v832 = vtanh.pop %v831
    %v833 = vsub.f32 1.0, %v822
    %835 = vrot.lane.b32.xlu0 %v832, 112
    %v836 = vpop.permute.xlu0 %835
    %v838 = vmul.f32 %v833, %v836
    %v839 = vmul.f32 %v822, %v695
    %v840 = vadd.f32 %v838, %v839
    %842 = vrot.lane.b32.xlu0 %v798, 112
    %v843 = vpop.permute.xlu0 %842
    %845 = vst.msk [vmem:[#allocation8 + $0x8] sm:$0x3] %vm263, %v843
    %847 = vrot.lane.b32.xlu0 %v840, 80
    %v848 = vpop.permute.xlu0 %847
    %850 = vst.msk [vmem:[#allocation8 + $0x6] sm:$0x3] %vm269, %v848
    %v851 = vld [vmem:[#allocation2 + $0xa] sm:$0x3]
    %v852 = vld [vmem:[#allocation2 + $0x4] sm:$0x3]
    %v853 = vld [vmem:[#allocation6 + $0x5] sm:$0x1]
    %v854 = vperm.slane %v853, 0
    %v855 = vadd.f32 %v851, %v854
    %v856 = vld [vmem:[#allocation6 + $0x2] sm:$0x1]
    %v857 = vperm.slane %v856, 0
    %v858 = vadd.f32 %v852, %v857
    %v859 = vsel %vm123, %v843, 0
    %861 = vmatpush.msra.mxu0 0.0
    %862 = vmatpush.msra.mxu0 0.0
    %863 = vmatpush.msra.mxu0 0.0
    %864 = vmatpush.msra.mxu0 0.0
    %865 = vmatpush.msra.mxu0 0.0
    %866 = vmatpush.msra.mxu0 0.0
    %867 = vmatpush.msra.mxu0 0.0
    %868 = vmatpush.msra.mxu0 0.0
    %869 = vmatpush.msra.mxu0 0.0
    %870 = vmatpush.msra.mxu0 0.0
    %871 = vmatpush.msra.mxu0 0.0
    %872 = vmatpush.msra.mxu0 0.0
    %873 = vmatpush.msra.mxu0 0.0
    %874 = vmatpush.msra.mxu0 0.0
    %875 = vmatpush.msra.mxu0 %v110
    %876 = vmatpush.msra.mxu0 %v109
    %877 = vmatmul.f32.gmra.mxu0 %v859
    %v878 = vpop.f32.mrf.mxu0
    %v879 = vadd.f32 %v113, %v878
    %880 = vdwg.mxu0
    %881 = vrot.lane.b32.xlu0 %v840, 64
    %v882 = vpop.permute.xlu0 %881
    %v883 = vsel %vm123, %v882, 0
    %885 = vmatpush.msra.mxu0 0.0
    %886 = vmatpush.msra.mxu0 0.0
    %887 = vmatpush.msra.mxu0 0.0
    %888 = vmatpush.msra.mxu0 0.0
    %889 = vmatpush.msra.mxu0 0.0
    %890 = vmatpush.msra.mxu0 0.0
    %891 = vmatpush.msra.mxu0 0.0
    %892 = vmatpush.msra.mxu0 0.0
    %893 = vmatpush.msra.mxu0 0.0
    %894 = vmatpush.msra.mxu0 0.0
    %895 = vmatpush.msra.mxu0 0.0
    %896 = vmatpush.msra.mxu0 0.0
    %897 = vmatpush.msra.mxu0 0.0
    %898 = vmatpush.msra.mxu0 0.0
    %899 = vmatpush.msra.mxu0 %v152
    %900 = vmatpush.msra.mxu0 %v150
    %901 = vmatmul.f32.gmra.mxu0 %v883
    %v902 = vpop.f32.mrf.mxu0
    %v903 = vadd.f32 %v156, %v902
    %904 = vdwg.mxu0
    %v905 = vadd.f32 %v855, %v879
    %v906 = vxor.u32 %v905, 2147483648
    %v907 = vmul.f32 %v906, 1.442695
    %v908 = vpow.pop %v907
    %v909 = vadd.f32 %v908, 1.0
    %v910 = vrcp.pop %v909
    %v911 = vmul.f32 %v909, %v910
    %v912 = vsub.f32 1.0, %v911
    %v913 = vmul.f32 %v910, %v912
    %v914 = vadd.f32 %v910, %v913
    %vm915 = vweird.f32 %v909
    %vm916 = vweird.f32 %v910
    %vm917 = vmor %vm915, %vm916
    %v918 = vsel %vm917, %v910, %v914
    %v919 = vand.u32 2147483647, %v909
    %vm920 = vcmp.eq.f32.partialorder %v919, 8.507059e+37
    %v921 = vand.u32 %v909, 2147483648
    %v922 = vor.u32 1.1754944e-38, %v921
    %v923 = vsel %vm920, %v922, %v918
    %v924 = vmul.f32 1.0, %v923
    %926 = vrot.lane.b32.xlu0 %v879, 96
    %v927 = vpop.permute.xlu0 %926
    %v929 = vmul.f32 %v924, %v927
    %931 = vrot.lane.b32.xlu0 %v929, 32
    %v932 = vpop.permute.xlu0 %931
    %v934 = vadd.f32 %v855, %v932
    %v935 = vtanh.pop %v934
    %v936 = vsub.f32 1.0, %v924
    %938 = vrot.lane.b32.xlu0 %v935, 112
    %v939 = vpop.permute.xlu0 %938
    %v941 = vmul.f32 %v936, %v939
    %v942 = vmul.f32 %v924, %v798
    %v943 = vadd.f32 %v941, %v942
    %945 = vrot.lane.b32.xlu0 %v903, 48
    %v946 = vpop.permute.xlu0 %945
    %v948 = vadd.f32 %v858, %v946
    %v949 = vxor.u32 %v948, 2147483648
    %v950 = vmul.f32 %v949, 1.442695
    %v951 = vpow.pop %v950
    %v952 = vadd.f32 %v951, 1.0
    %v953 = vrcp.pop %v952
    %v954 = vmul.f32 %v952, %v953
    %v955 = vsub.f32 1.0, %v954
    %v956 = vmul.f32 %v953, %v955
    %v957 = vadd.f32 %v953, %v956
    %vm958 = vweird.f32 %v952
    %vm959 = vweird.f32 %v953
    %vm960 = vmor %vm958, %vm959
    %v961 = vsel %vm960, %v953, %v957
    %v962 = vand.u32 2147483647, %v952
    %vm963 = vcmp.eq.f32.partialorder %v962, 8.507059e+37
    %v964 = vand.u32 %v952, 2147483648
    %v965 = vor.u32 1.1754944e-38, %v964
    %v966 = vsel %vm963, %v965, %v961
    %v967 = vmul.f32 1.0, %v966
    %968 = vrot.lane.b32.xlu0 %v903, 16
    %v969 = vpop.permute.xlu0 %968
    %v971 = vmul.f32 %v967, %v969
    %973 = vrot.lane.b32.xlu0 %v971, 32
    %v974 = vpop.permute.xlu0 %973
    %v976 = vadd.f32 %v858, %v974
    %v977 = vtanh.pop %v976
    %v978 = vsub.f32 1.0, %v967
    %980 = vrot.lane.b32.xlu0 %v977, 112
    %v981 = vpop.permute.xlu0 %980
    %v983 = vmul.f32 %v978, %v981
    %v984 = vmul.f32 %v967, %v840
    %v985 = vadd.f32 %v983, %v984
    %987 = vrot.lane.b32.xlu0 %v943, 112
    %v988 = vpop.permute.xlu0 %987
    %990 = vst.msk [vmem:[#allocation8 + $0xa] sm:$0x3] %vm263, %v988
    %992 = vrot.lane.b32.xlu0 %v985, 80
    %v993 = vpop.permute.xlu0 %992
    %995 = vst.msk [vmem:[#allocation8 + $0x4] sm:$0x3] %vm269, %v993
    %v996 = vld [vmem:[#allocation2 + $0xc] sm:$0x3]
    %v997 = vld [vmem:[#allocation2 + $0x2] sm:$0x3]
    %v998 = vld [vmem:[#allocation6 + $0x6] sm:$0x1]
    %v999 = vperm.slane %v998, 0
    %v1000 = vadd.f32 %v996, %v999
    %v1001 = vld [vmem:[#allocation6 + $0x1] sm:$0x1]
    %v1002 = vperm.slane %v1001, 0
    %v1003 = vadd.f32 %v997, %v1002
    %v1004 = vsel %vm123, %v988, 0
    %1006 = vmatpush.msra.mxu0 0.0
    %1007 = vmatpush.msra.mxu0 0.0
    %1008 = vmatpush.msra.mxu0 0.0
    %1009 = vmatpush.msra.mxu0 0.0
    %1010 = vmatpush.msra.mxu0 0.0
    %1011 = vmatpush.msra.mxu0 0.0
    %1012 = vmatpush.msra.mxu0 0.0
    %1013 = vmatpush.msra.mxu0 0.0
    %1014 = vmatpush.msra.mxu0 0.0
    %1015 = vmatpush.msra.mxu0 0.0
    %1016 = vmatpush.msra.mxu0 0.0
    %1017 = vmatpush.msra.mxu0 0.0
    %1018 = vmatpush.msra.mxu0 0.0
    %1019 = vmatpush.msra.mxu0 0.0
    %1020 = vmatpush.msra.mxu0 %v110
    %1021 = vmatpush.msra.mxu0 %v109
    %1022 = vmatmul.f32.gmra.mxu0 %v1004
    %v1023 = vpop.f32.mrf.mxu0
    %v1024 = vadd.f32 %v113, %v1023
    %1025 = vdwg.mxu0
    %1026 = vrot.lane.b32.xlu0 %v985, 64
    %v1027 = vpop.permute.xlu0 %1026
    %v1028 = vsel %vm123, %v1027, 0
    %1030 = vmatpush.msra.mxu0 0.0
    %1031 = vmatpush.msra.mxu0 0.0
    %1032 = vmatpush.msra.mxu0 0.0
    %1033 = vmatpush.msra.mxu0 0.0
    %1034 = vmatpush.msra.mxu0 0.0
    %1035 = vmatpush.msra.mxu0 0.0
    %1036 = vmatpush.msra.mxu0 0.0
    %1037 = vmatpush.msra.mxu0 0.0
    %1038 = vmatpush.msra.mxu0 0.0
    %1039 = vmatpush.msra.mxu0 0.0
    %1040 = vmatpush.msra.mxu0 0.0
    %1041 = vmatpush.msra.mxu0 0.0
    %1042 = vmatpush.msra.mxu0 0.0
    %1043 = vmatpush.msra.mxu0 0.0
    %1044 = vmatpush.msra.mxu0 %v152
    %1045 = vmatpush.msra.mxu0 %v150
    %1046 = vmatmul.f32.gmra.mxu0 %v1028
    %v1047 = vpop.f32.mrf.mxu0
    %v1048 = vadd.f32 %v156, %v1047
    %1049 = vdwg.mxu0
    %v1050 = vadd.f32 %v1000, %v1024
    %v1051 = vxor.u32 %v1050, 2147483648
    %v1052 = vmul.f32 %v1051, 1.442695
    %v1053 = vpow.pop %v1052
    %v1054 = vadd.f32 %v1053, 1.0
    %v1055 = vrcp.pop %v1054
    %v1056 = vmul.f32 %v1054, %v1055
    %v1057 = vsub.f32 1.0, %v1056
    %v1058 = vmul.f32 %v1055, %v1057
    %v1059 = vadd.f32 %v1055, %v1058
    %vm1060 = vweird.f32 %v1054
    %vm1061 = vweird.f32 %v1055
    %vm1062 = vmor %vm1060, %vm1061
    %v1063 = vsel %vm1062, %v1055, %v1059
    %v1064 = vand.u32 2147483647, %v1054
    %vm1065 = vcmp.eq.f32.partialorder %v1064, 8.507059e+37
    %v1066 = vand.u32 %v1054, 2147483648
    %v1067 = vor.u32 1.1754944e-38, %v1066
    %v1068 = vsel %vm1065, %v1067, %v1063
    %v1069 = vmul.f32 1.0, %v1068
    %1071 = vrot.lane.b32.xlu0 %v1024, 96
    %v1072 = vpop.permute.xlu0 %1071
    %v1074 = vmul.f32 %v1069, %v1072
    %1076 = vrot.lane.b32.xlu0 %v1074, 32
    %v1077 = vpop.permute.xlu0 %1076
    %v1079 = vadd.f32 %v1000, %v1077
    %v1080 = vtanh.pop %v1079
    %v1081 = vsub.f32 1.0, %v1069
    %1083 = vrot.lane.b32.xlu0 %v1080, 112
    %v1084 = vpop.permute.xlu0 %1083
    %v1086 = vmul.f32 %v1081, %v1084
    %v1087 = vmul.f32 %v1069, %v943
    %v1088 = vadd.f32 %v1086, %v1087
    %1090 = vrot.lane.b32.xlu0 %v1048, 48
    %v1091 = vpop.permute.xlu0 %1090
    %v1093 = vadd.f32 %v1003, %v1091
    %v1094 = vxor.u32 %v1093, 2147483648
    %v1095 = vmul.f32 %v1094, 1.442695
    %v1096 = vpow.pop %v1095
    %v1097 = vadd.f32 %v1096, 1.0
    %v1098 = vrcp.pop %v1097
    %v1099 = vmul.f32 %v1097, %v1098
    %v1100 = vsub.f32 1.0, %v1099
    %v1101 = vmul.f32 %v1098, %v1100
    %v1102 = vadd.f32 %v1098, %v1101
    %vm1103 = vweird.f32 %v1097
    %vm1104 = vweird.f32 %v1098
    %vm1105 = vmor %vm1103, %vm1104
    %v1106 = vsel %vm1105, %v1098, %v1102
    %v1107 = vand.u32 2147483647, %v1097
    %vm1108 = vcmp.eq.f32.partialorder %v1107, 8.507059e+37
    %v1109 = vand.u32 %v1097, 2147483648
    %v1110 = vor.u32 1.1754944e-38, %v1109
    %v1111 = vsel %vm1108, %v1110, %v1106
    %v1112 = vmul.f32 1.0, %v1111
    %1113 = vrot.lane.b32.xlu0 %v1048, 16
    %v1114 = vpop.permute.xlu0 %1113
    %v1116 = vmul.f32 %v1112, %v1114
    %1118 = vrot.lane.b32.xlu0 %v1116, 32
    %v1119 = vpop.permute.xlu0 %1118
    %v1121 = vadd.f32 %v1003, %v1119
    %v1122 = vtanh.pop %v1121
    %v1123 = vsub.f32 1.0, %v1112
    %1125 = vrot.lane.b32.xlu0 %v1122, 112
    %v1126 = vpop.permute.xlu0 %1125
    %v1128 = vmul.f32 %v1123, %v1126
    %v1129 = vmul.f32 %v1112, %v985
    %v1130 = vadd.f32 %v1128, %v1129
    %1132 = vrot.lane.b32.xlu0 %v1088, 112
    %v1133 = vpop.permute.xlu0 %1132
    %1135 = vst.msk [vmem:[#allocation8 + $0xc] sm:$0x3] %vm263, %v1133
    %1137 = vrot.lane.b32.xlu0 %v1130, 80
    %v1138 = vpop.permute.xlu0 %1137
    %1140 = vst.msk [vmem:[#allocation8 + $0x2] sm:$0x3] %vm269, %v1138
    %v1141 = vld [vmem:[#allocation2 + $0xe] sm:$0x3]
    %v1142 = vld [vmem:[#allocation2] sm:$0x3]
    %v1143 = vld [vmem:[#allocation6 + $0x7] sm:$0x1]
    %v1144 = vperm.slane %v1143, 0
    %v1145 = vadd.f32 %v1141, %v1144
    %v1146 = vld [vmem:[#allocation6] sm:$0x1]
    %v1147 = vperm.slane %v1146, 0
    %v1148 = vadd.f32 %v1142, %v1147
    %v1149 = vsel %vm123, %v1133, 0
    %1151 = vmatpush.msra.mxu0 0.0
    %1152 = vmatpush.msra.mxu0 0.0
    %1153 = vmatpush.msra.mxu0 0.0
    %1154 = vmatpush.msra.mxu0 0.0
    %1155 = vmatpush.msra.mxu0 0.0
    %1156 = vmatpush.msra.mxu0 0.0
    %1157 = vmatpush.msra.mxu0 0.0
    %1158 = vmatpush.msra.mxu0 0.0
    %1159 = vmatpush.msra.mxu0 0.0
    %1160 = vmatpush.msra.mxu0 0.0
    %1161 = vmatpush.msra.mxu0 0.0
    %1162 = vmatpush.msra.mxu0 0.0
    %1163 = vmatpush.msra.mxu0 0.0
    %1164 = vmatpush.msra.mxu0 0.0
    %1165 = vmatpush.msra.mxu0 %v110
    %1166 = vmatpush.msra.mxu0 %v109
    %1167 = vmatmul.f32.gmra.mxu0 %v1149
    %v1168 = vpop.f32.mrf.mxu0
    %v1169 = vadd.f32 %v113, %v1168
    %1170 = vdwg.mxu0
    %1171 = vrot.lane.b32.xlu0 %v1130, 64
    %v1172 = vpop.permute.xlu0 %1171
    %v1173 = vsel %vm123, %v1172, 0
    %1175 = vmatpush.msra.mxu0 0.0
    %1176 = vmatpush.msra.mxu0 0.0
    %1177 = vmatpush.msra.mxu0 0.0
    %1178 = vmatpush.msra.mxu0 0.0
    %1179 = vmatpush.msra.mxu0 0.0
    %1180 = vmatpush.msra.mxu0 0.0
    %1181 = vmatpush.msra.mxu0 0.0
    %1182 = vmatpush.msra.mxu0 0.0
    %1183 = vmatpush.msra.mxu0 0.0
    %1184 = vmatpush.msra.mxu0 0.0
    %1185 = vmatpush.msra.mxu0 0.0
    %1186 = vmatpush.msra.mxu0 0.0
    %1187 = vmatpush.msra.mxu0 0.0
    %1188 = vmatpush.msra.mxu0 0.0
    %1189 = vmatpush.msra.mxu0 %v152
    %1190 = vmatpush.msra.mxu0 %v150
    %1191 = vmatmul.f32.gmra.mxu0 %v1173
    %v1192 = vpop.f32.mrf.mxu0
    %v1193 = vadd.f32 %v156, %v1192
    %1194 = vdwg.mxu0
    %v1195 = vadd.f32 %v1145, %v1169
    %v1196 = vxor.u32 %v1195, 2147483648
    %v1197 = vmul.f32 %v1196, 1.442695
    %v1198 = vpow.pop %v1197
    %v1199 = vadd.f32 %v1198, 1.0
    %v1200 = vrcp.pop %v1199
    %v1201 = vmul.f32 %v1199, %v1200
    %v1202 = vsub.f32 1.0, %v1201
    %v1203 = vmul.f32 %v1200, %v1202
    %v1204 = vadd.f32 %v1200, %v1203
    %vm1205 = vweird.f32 %v1199
    %vm1206 = vweird.f32 %v1200
    %vm1207 = vmor %vm1205, %vm1206
    %v1208 = vsel %vm1207, %v1200, %v1204
    %v1209 = vand.u32 2147483647, %v1199
    %vm1210 = vcmp.eq.f32.partialorder %v1209, 8.507059e+37
    %v1211 = vand.u32 %v1199, 2147483648
    %v1212 = vor.u32 1.1754944e-38, %v1211
    %v1213 = vsel %vm1210, %v1212, %v1208
    %v1214 = vmul.f32 1.0, %v1213
    %1216 = vrot.lane.b32.xlu0 %v1169, 96
    %v1217 = vpop.permute.xlu0 %1216
    %v1219 = vmul.f32 %v1214, %v1217
    %1221 = vrot.lane.b32.xlu0 %v1219, 32
    %v1222 = vpop.permute.xlu0 %1221
    %v1224 = vadd.f32 %v1145, %v1222
    %v1225 = vtanh.pop %v1224
    %v1226 = vsub.f32 1.0, %v1214
    %1228 = vrot.lane.b32.xlu0 %v1225, 112
    %v1229 = vpop.permute.xlu0 %1228
    %v1231 = vmul.f32 %v1226, %v1229
    %v1232 = vmul.f32 %v1214, %v1088
    %v1233 = vadd.f32 %v1231, %v1232
    %1235 = vrot.lane.b32.xlu0 %v1193, 48
    %v1236 = vpop.permute.xlu0 %1235
    %v1238 = vadd.f32 %v1148, %v1236
    %v1239 = vxor.u32 %v1238, 2147483648
    %v1240 = vmul.f32 %v1239, 1.442695
    %v1241 = vpow.pop %v1240
    %v1242 = vadd.f32 %v1241, 1.0
    %v1243 = vrcp.pop %v1242
    %v1244 = vmul.f32 %v1242, %v1243
    %v1245 = vsub.f32 1.0, %v1244
    %v1246 = vmul.f32 %v1243, %v1245
    %v1247 = vadd.f32 %v1243, %v1246
    %vm1248 = vweird.f32 %v1242
    %vm1249 = vweird.f32 %v1243
    %vm1250 = vmor %vm1248, %vm1249
    %v1251 = vsel %vm1250, %v1243, %v1247
    %v1252 = vand.u32 2147483647, %v1242
    %vm1253 = vcmp.eq.f32.partialorder %v1252, 8.507059e+37
    %v1254 = vand.u32 %v1242, 2147483648
    %v1255 = vor.u32 1.1754944e-38, %v1254
    %v1256 = vsel %vm1253, %v1255, %v1251
    %v1257 = vmul.f32 1.0, %v1256
    %1258 = vrot.lane.b32.xlu0 %v1193, 16
    %v1259 = vpop.permute.xlu0 %1258
    %v1261 = vmul.f32 %v1257, %v1259
    %1263 = vrot.lane.b32.xlu0 %v1261, 32
    %v1264 = vpop.permute.xlu0 %1263
    %v1266 = vadd.f32 %v1148, %v1264
    %v1267 = vtanh.pop %v1266
    %v1268 = vsub.f32 1.0, %v1257
    %1270 = vrot.lane.b32.xlu0 %v1267, 112
    %v1271 = vpop.permute.xlu0 %1270
    %v1273 = vmul.f32 %v1268, %v1271
    %v1274 = vmul.f32 %v1257, %v1130
    %v1275 = vadd.f32 %v1273, %v1274
    %1277 = vrot.lane.b32.xlu0 %v1233, 112
    %v1278 = vpop.permute.xlu0 %1277
    %1280 = vst.msk [vmem:[#allocation8 + $0xe] sm:$0x3] %vm263, %v1278
    %1282 = vrot.lane.b32.xlu0 %v1275, 80
    %v1283 = vpop.permute.xlu0 %1282
    %1285 = vst.msk [vmem:[#allocation8] sm:$0x3] %vm269, %v1283
    // Predicated region
    $region30: #{tpu_custom_call.1} parent=1 // pred_check
      _
    $region31: #{tpu_custom_call.1} parent=1 // pred_check_branch
      %1287 = sbr.rel (0) target = $region33
    $region32: #{tpu_custom_call.1} parent=1 // pred_region
      %1289 = vsyncadd [#allocation5], 0
      %s1290 = sshll.u32 [#allocation8], 4
      %s1291 = int_to_ptr.vmem [resolvable:$true] %s1290
      %s1292 = sshll.u32 %s5, 4
      %s1293 = int_to_ptr.hbm [resolvable:$true] %s1292
      %1298 = dma.vmem_to_hbm [thread:$0]  %s1291, 256, %s1293, [#allocation5], 128, 128, 8
    $region33: #{tpu_custom_call.1} parent=1 // pred_fallthru
      _
    // Predicated region
    $region34: #{tpu_custom_call.1} parent=1 // pred_check
      _
    $region35: #{tpu_custom_call.1} parent=1 // pred_check_branch
      %1300 = sbr.rel (0) target = $region37
    $region36: #{tpu_custom_call.1} parent=1 // pred_region
      %1302 = dma.done [#allocation5], 256
    $region37: #{tpu_custom_call.1} parent=1 // pred_fallthru
      _
    %1303 = vsyncpa [#allocation4], 1
    %1304 = vsyncpa [#allocation7], 1
    %1305 = vsyncpa [#allocation5], 1

</llo_original>
